<compile_context>
chip_gen: v7x
topology: tpu7x:2x2x1
jax: 0.10.0
libtpu: 0.0.40
codegen_flags: <defaults>
</compile_context>

<pallas_src>
import jax
import jax.numpy as jnp
import numpy as np
from jax.experimental import pallas as pl
from jax.experimental.pallas import tpu as pltpu


def _round_up(a, b):
    return ((a + b - 1) // b) * b


def torchmd_net_kernel(x_ref, z_ref, batch_ref,
                       w1_ref, b1_ref, w2_ref,
                       atomref_ref, scalars_ref,
                       out_ref):
    n_mol = out_ref.shape[0]
    n_types = atomref_ref.shape[0]
    tm = x_ref.shape[0]

    # ---- zero this core-split's per-molecule accumulator on its first atom tile ----
    @pl.when(pl.program_id(1) == 0)
    def _():
        out_ref[...] = jnp.zeros_like(out_ref)

    # ---- output_model.pre_reduce : Linear(H, H//2) -> SiLU -> Linear(H//2, 1) ----
    # bf16 x bf16 on the MXU, f32 accumulate; everything downstream stays f32.
    h = jnp.dot(x_ref[...], w1_ref[...], preferred_element_type=jnp.float32)   # [TM, H2]
    h = h + b1_ref[...]
    h = h * jax.nn.sigmoid(h)                                                   # SiLU (EUP + VPU), f32

    std = scalars_ref[0]
    mean = scalars_ref[1]
    b2 = scalars_ref[2]

    # Second linear as an MXU dot (K=H2, N=1) instead of VPU-mul + lane reduce.
    e = jnp.dot(h, w2_ref[...], preferred_element_type=jnp.float32) + b2        # [TM, 1]

    # ---- atomref(z) lookup: type one-hot @ atomref column on the MXU ----
    z = z_ref[...].astype(jnp.int32)                                            # [TM, 1] (padded rows = -1)
    t_iota = jax.lax.broadcasted_iota(jnp.int32, (tm, n_types), 1)
    onehot_t = (z == t_iota).astype(jnp.float32)                                # [TM, T]
    e_ar = jnp.dot(onehot_t, atomref_ref[...], preferred_element_type=jnp.float32)  # [TM, 1]

    # atom-level std/mean fused with the atomref add (f32 VPU).
    e_total = e * std + mean + e_ar                                             # [TM, 1]

    # ---- scatter(..., reduce='add'): lane-major one-hot segment-sum on the MXU, K = atom tile ----
    b_row = batch_ref[...]                                                      # [1, TM] (padded cols = n_mol)
    m_iota = jax.lax.broadcasted_iota(jnp.int32, (n_mol, tm), 0)
    onehot_m = (m_iota == b_row).astype(jnp.float32)                            # [B, TM] f32
    out_ref[...] += jnp.dot(onehot_m, e_total, preferred_element_type=jnp.float32)


def torchmd_net_forward(x, z, batch, w1, b1, w2, b2, atomref, mean, std,
                        n_mol, *, tile_atoms=4096, num_core_splits=2):
    """x:[N,H], z:[N] int, batch:[N] int (sorted), w1:[H,H2], b1:[H2], w2:[H2], b2 scalar,
    atomref:[T] (or None), mean/std scalars. Returns per-molecule energies [n_mol, 1]."""
    n_atoms, hidden = x.shape
    h2 = w1.shape[1]
    if atomref is None:
        atomref = jnp.zeros((1,), jnp.float32)
    atomref_col = jnp.asarray(atomref, jnp.float32).reshape(-1, 1)
    n_types = atomref_col.shape[0]

    # Atom tile: always a multiple of 128 lanes (the [1, TM] batch row is gridded along lanes).
    tm = _round_up(min(tile_atoms, max(n_atoms, 1)), 128)
    n_pad = _round_up(n_atoms, tm * num_core_splits)
    pad = n_pad - n_atoms
    tiles_per_split = n_pad // (tm * num_core_splits)

    # Streamed operands: x/w1 in bf16 (halves HBM traffic), z as int8 column, batch lane-major i32.
    x = jnp.asarray(x).astype(jnp.bfloat16)
    z_dtype = jnp.int8 if n_types < 128 else jnp.int32
    z = jnp.asarray(z).reshape(-1).astype(z_dtype)
    batch = jnp.asarray(batch, jnp.int32).reshape(-1)
    if pad:
        x = jnp.pad(x, ((0, pad), (0, 0)))
        z = jnp.pad(z, (0, pad), constant_values=-1)              # matches no atomref row
        batch = jnp.pad(batch, (0, pad), constant_values=n_mol)   # matches no molecule -> dropped

    z_col = z.reshape(n_pad, 1)
    batch_row = batch.reshape(1, n_pad)
    w1 = jnp.asarray(w1).astype(jnp.bfloat16)
    b1_row = jnp.asarray(b1, jnp.float32).reshape(1, h2)
    w2_col = jnp.asarray(w2, jnp.float32).reshape(h2, 1)
    scalars = jnp.asarray([std, mean, b2], dtype=jnp.float32)     # SMEM: [std, mean, b2]

    # ---- VMEM budget (double-buffered streams + weights + f32 intermediates) with headroom ----
    LANE = 128
    z_bytes = 1 if z_dtype == jnp.int8 else 4
    streamed = 2 * (tm * hidden * 2 + tm * LANE * z_bytes + 8 * tm * 4)
    weights = 2 * (hidden * h2 * 2 + 3 * 8 * LANE * 4 + _round_up(n_types, 8) * LANE * 4)
    outbuf = 2 * (_round_up(n_mol, 8) * LANE * 4)
    interm = tm * h2 * 4 + 2 * tm * LANE * 4 + _round_up(n_mol, 8) * tm * 4
    vmem_limit = min(int(1.25 * (streamed + weights + outbuf + interm)) + (4 << 20), 56 << 20)

    grid = (num_core_splits, tiles_per_split)
    tps = tiles_per_split  # captured by the index_maps

    grid_spec = pltpu.PrefetchScalarGridSpec(
        num_scalar_prefetch=0,
        grid=grid,
        in_specs=[
            pl.BlockSpec((tm, hidden), lambda c, i: (c * tps + i, 0)),   # x tile (streamed bf16)
            pl.BlockSpec((tm, 1), lambda c, i: (c * tps + i, 0)),        # z tile (int8 column)
            pl.BlockSpec((1, tm), lambda c, i: (0, c * tps + i)),        # batch tile (lane-major)
            pl.BlockSpec((hidden, h2), lambda c, i: (0, 0)),             # w1 (VMEM-resident)
            pl.BlockSpec((1, h2), lambda c, i: (0, 0)),                  # b1
            pl.BlockSpec((h2, 1), lambda c, i: (0, 0)),                  # w2 column
            pl.BlockSpec((n_types, 1), lambda c, i: (0, 0)),             # atomref column
            pl.BlockSpec(memory_space=pltpu.MemorySpace.SMEM),           # [std, mean, b2]
        ],
        # One resident [B,1] accumulator per core split (leading axis squeezed in-kernel).
        out_specs=pl.BlockSpec((None, n_mol, 1), lambda c, i: (c, 0, 0)),
    )

    flops = n_pad * (2 * hidden * h2 + 8 * h2 + 4 * n_types + 4 * n_mol + 8)
    bytes_accessed = (n_pad * (hidden * 2 + z_bytes + 4)
                      + hidden * h2 * 2
                      + (h2 * 2 + n_types + 3 + num_core_splits * n_mol) * 4)

    partials = pl.pallas_call(
        torchmd_net_kernel,
        out_shape=jax.ShapeDtypeStruct((num_core_splits, n_mol, 1), jnp.float32),
        grid_spec=grid_spec,
        compiler_params=pltpu.CompilerParams(
            # core-split axis is independent (megacore on v7x); atom axis accumulates -> "arbitrary"
            dimension_semantics=("parallel", "arbitrary"),
            vmem_limit_bytes=vmem_limit,
        ),
        cost_estimate=pl.CostEstimate(
            flops=flops,
            transcendentals=n_pad * h2,
            bytes_accessed=bytes_accessed,
        ),
    )(x, z_col, batch_row, w1, b1_row, w2_col, atomref_col, scalars)

    # Combine the per-core partial energies (tiny [C, B, 1] reduction outside the kernel).
    return jnp.sum(partials, axis=0)


def reference_forward(x, z, batch, w1, b1, w2, b2, atomref, mean, std, n_mol):
    h = x @ w1 + b1.reshape(1, -1)
    h = h * jax.nn.sigmoid(h)
    e = h @ w2.reshape(-1, 1) + b2
    e = e * std + mean
    e = e + atomref.reshape(-1)[z][:, None]
    return jax.ops.segment_sum(e, batch, num_segments=n_mol)


if __name__ == "__main__":
    # Small deterministic shapes: 250 atoms (exercises tile padding + the 2-way core split),
    # hidden=128, 8 molecules, 16 atom types.
    N_ATOMS, HIDDEN, N_MOL, N_TYPES = 250, 128, 8, 16
    H2 = HIDDEN // 2

    key = jax.random.PRNGKey(0)
    k_x, k_w1, k_b1, k_w2, k_b2, k_ar, k_z, k_b = jax.random.split(key, 8)

    x = jax.random.normal(k_x, (N_ATOMS, HIDDEN), dtype=jnp.float32)
    z = jax.random.randint(k_z, (N_ATOMS,), 0, N_TYPES, dtype=jnp.int32)
    batch = jnp.sort(jax.random.randint(k_b, (N_ATOMS,), 0, N_MOL, dtype=jnp.int32))

    # Scalar output head parameters (Linear(H, H//2), SiLU, Linear(H//2, 1)).
    w1 = jax.random.normal(k_w1, (HIDDEN, H2), dtype=jnp.float32) / np.sqrt(HIDDEN)
    b1 = jax.random.normal(k_b1, (H2,), dtype=jnp.float32) * 0.1
    w2 = jax.random.normal(k_w2, (H2,), dtype=jnp.float32) / np.sqrt(H2)
    b2 = float(jax.random.normal(k_b2, (), dtype=jnp.float32) * 0.1)

    # atomref embedding table and atom-level mean/std buffers.
    atomref = jax.random.normal(k_ar, (N_TYPES,), dtype=jnp.float32)
    std, mean = 2.5, -1.3

    # Pre-round the bf16-streamed operands so the f32 reference sees the same values the kernel does.
    x = x.astype(jnp.bfloat16).astype(jnp.float32)
    w1 = w1.astype(jnp.bfloat16).astype(jnp.float32)

    # tile_atoms=128, num_core_splits=2 -> grid (2, 1) over the padded 256 atoms
    # (exercises the parallel core-split axis, the accumulating atom axis and the padding path).
    out = torchmd_net_forward(x, z, batch, w1, b1, w2, b2, atomref, mean, std,
                              N_MOL, tile_atoms=128, num_core_splits=2)
    out = jax.block_until_ready(out)

    expected = reference_forward(x, z, batch, w1, b1, w2, b2, atomref, mean, std, N_MOL)
    expected = jax.block_until_ready(expected)

    assert out.shape == (N_MOL, 1)
    np.testing.assert_allclose(np.asarray(out), np.asarray(expected), rtol=1e-3, atol=1e-3)
    print("KERNEL_OK")
</pallas_src>

<mosaic_0001>
module attributes {stable_mosaic.version = 11 : i64} {
  func.func @torchmd_net_kernel(%arg0: i32, %arg1: i32, %arg2: memref<128x128xbf16, #tpu.memory_space<vmem>>, %arg3: memref<128x1xi8, #tpu.memory_space<vmem>>, %arg4: memref<1x128xi32, #tpu.memory_space<vmem>>, %arg5: memref<128x64xbf16, #tpu.memory_space<vmem>>, %arg6: memref<1x64xf32, #tpu.memory_space<vmem>>, %arg7: memref<64x1xf32, #tpu.memory_space<vmem>>, %arg8: memref<16x1xf32, #tpu.memory_space<vmem>>, %arg9: memref<3xf32, #tpu.memory_space<smem>>, %arg10: memref<1x8x1xf32, #tpu.memory_space<vmem>>) attributes {dimension_semantics = [#tpu.dimension_semantics<parallel>, #tpu.dimension_semantics<arbitrary>], iteration_bounds = array<i64: 2, 1>, scalar_prefetch = 0 : i64, scratch_operands = 0 : i64, tpu.core_type = #tpu.core_type<tc>, window_params = [{transform_indices = @transform_0, window_bounds = array<i64: 128, 128>}, {transform_indices = @transform_1, window_bounds = array<i64: 128, 1>}, {transform_indices = @transform_2, window_bounds = array<i64: 1, 128>}, {pipeline_mode = #tpu.pipeline_mode<synchronous>, transform_indices = @transform_3, window_bounds = array<i64: 128, 64>}, {pipeline_mode = #tpu.pipeline_mode<synchronous>, transform_indices = @transform_4, window_bounds = array<i64: 1, 64>}, {pipeline_mode = #tpu.pipeline_mode<synchronous>, transform_indices = @transform_5, window_bounds = array<i64: 64, 1>}, {pipeline_mode = #tpu.pipeline_mode<synchronous>, transform_indices = @transform_6, window_bounds = array<i64: 16, 1>}, {transform_indices = @transform_7, window_bounds = array<i64: 3>}, {transform_indices = @transform_8, window_bounds = array<i64: 1, 8, 1>}]} {
    %c0_i32 = arith.constant 0 : i32
    %0 = arith.cmpi eq, %arg1, %c0_i32 : i32
    %1 = arith.extui %0 : i1 to i32
    %c0_i32_0 = arith.constant 0 : i32
    %2 = arith.cmpi ne, %1, %c0_i32_0 : i32
    scf.if %2 {
      %cst_25 = arith.constant 0.000000e+00 : f32
      %49 = vector.broadcast %cst_25 : f32 to vector<8x1xf32>
      %c0_26 = arith.constant 0 : index
      %c0_27 = arith.constant 0 : index
      %c0_28 = arith.constant 0 : index
      %50 = vector.load %arg10[%c0_26, %c0_27, %c0_28] : memref<1x8x1xf32, #tpu.memory_space<vmem>>, vector<1x8x1xf32>
      %51 = vector.shape_cast %50 : vector<1x8x1xf32> to vector<8x1xf32>
      %52 = vector.shape_cast %49 : vector<8x1xf32> to vector<1x8x1xf32>
      tpu.vector_store %arg10[%c0_26, %c0_27, %c0_28], %52 {strides = array<i32>} : memref<1x8x1xf32, #tpu.memory_space<vmem>>, vector<1x8x1xf32>,
    } else {
    }
    %c0 = arith.constant 0 : index
    %c0_1 = arith.constant 0 : index
    %3 = vector.load %arg2[%c0, %c0_1] : memref<128x128xbf16, #tpu.memory_space<vmem>>, vector<128x128xbf16>
    %c0_2 = arith.constant 0 : index
    %c0_3 = arith.constant 0 : index
    %4 = vector.load %arg5[%c0_2, %c0_3] : memref<128x64xbf16, #tpu.memory_space<vmem>>, vector<128x64xbf16>
    %cst = arith.constant dense<0.000000e+00> : vector<128x64xf32>
    %5 = tpu.matmul %3, %4, %cst {dimension_numbers = #tpu.dot_dimension_numbers<[1], [0], [0], [1], [0, 0, 1, 1], [], []>} : vector<128x128xbf16>, vector<128x64xbf16>, vector<128x64xf32> -> vector<128x64xf32>
    %c0_4 = arith.constant 0 : index
    %c0_5 = arith.constant 0 : index
    %6 = vector.load %arg6[%c0_4, %c0_5] : memref<1x64xf32, #tpu.memory_space<vmem>>, vector<1x64xf32>
    %7 = vector.broadcast %6 : vector<1x64xf32> to vector<128x64xf32>
    %8 = arith.addf %5, %7 : vector<128x64xf32>
    %9 = arith.negf %8 : vector<128x64xf32>
    %10 = math.exp %9 : vector<128x64xf32>
    %cst_6 = arith.constant 1.000000e+00 : f32
    %11 = vector.broadcast %cst_6 : f32 to vector<128x64xf32>
    %12 = arith.addf %11, %10 : vector<128x64xf32>
    %13 = arith.divf %11, %12 : vector<128x64xf32>
    %14 = arith.mulf %8, %13 : vector<128x64xf32>
    %c0_7 = arith.constant 0 : index
    %15 = memref.load %arg9[%c0_7] : memref<3xf32, #tpu.memory_space<smem>>
    %c1 = arith.constant 1 : index
    %16 = memref.load %arg9[%c1] : memref<3xf32, #tpu.memory_space<smem>>
    %c2 = arith.constant 2 : index
    %17 = memref.load %arg9[%c2] : memref<3xf32, #tpu.memory_space<smem>>
    %c0_8 = arith.constant 0 : index
    %c0_9 = arith.constant 0 : index
    %18 = vector.load %arg7[%c0_8, %c0_9] : memref<64x1xf32, #tpu.memory_space<vmem>>, vector<64x1xf32>
    %cst_10 = arith.constant dense<0.000000e+00> : vector<128x1xf32>
    %19 = tpu.matmul %14, %18, %cst_10 {dimension_numbers = #tpu.dot_dimension_numbers<[1], [0], [0], [1], [0, 0, 1, 1], [], []>} : vector<128x64xf32>, vector<64x1xf32>, vector<128x1xf32> -> vector<128x1xf32>
    %20 = vector.broadcast %17 : f32 to vector<128x1xf32>
    %21 = arith.addf %19, %20 : vector<128x1xf32>
    %c0_11 = arith.constant 0 : index
    %c0_12 = arith.constant 0 : index
    %22 = vector.load %arg3[%c0_11, %c0_12] : memref<128x1xi8, #tpu.memory_space<vmem>>, vector<128x1xi8>
    %23 = arith.extsi %22 : vector<128x1xi8> to vector<128x1xi32>
    %24 = tpu.iota {dimensions = array<i32: 1>} : vector<128x16xi32>
    %25 = vector.broadcast %23 : vector<128x1xi32> to vector<128x16xi32>
    %26 = arith.cmpi eq, %25, %24 : vector<128x16xi32>
    %27 = arith.extui %26 : vector<128x16xi1> to vector<128x16xi32>
    %28 = arith.sitofp %27 : vector<128x16xi32> to vector<128x16xf32>
    %c0_13 = arith.constant 0 : index
    %c0_14 = arith.constant 0 : index
    %29 = vector.load %arg8[%c0_13, %c0_14] : memref<16x1xf32, #tpu.memory_space<vmem>>, vector<16x1xf32>
    %cst_15 = arith.constant dense<0.000000e+00> : vector<128x1xf32>
    %30 = tpu.matmul %28, %29, %cst_15 {dimension_numbers = #tpu.dot_dimension_numbers<[1], [0], [0], [1], [0, 0, 1, 1], [], []>} : vector<128x16xf32>, vector<16x1xf32>, vector<128x1xf32> -> vector<128x1xf32>
    %31 = vector.broadcast %15 : f32 to vector<128x1xf32>
    %32 = arith.mulf %21, %31 : vector<128x1xf32>
    %33 = vector.broadcast %16 : f32 to vector<128x1xf32>
    %34 = arith.addf %32, %33 : vector<128x1xf32>
    %35 = arith.addf %34, %30 : vector<128x1xf32>
    %c0_16 = arith.constant 0 : index
    %c0_17 = arith.constant 0 : index
    %36 = vector.load %arg4[%c0_16, %c0_17] : memref<1x128xi32, #tpu.memory_space<vmem>>, vector<1x128xi32>
    %37 = tpu.iota {dimensions = array<i32: 0>} : vector<8x128xi32>
    %38 = vector.broadcast %36 : vector<1x128xi32> to vector<8x128xi32>
    %39 = arith.cmpi eq, %37, %38 : vector<8x128xi32>
    %40 = arith.extui %39 : vector<8x128xi1> to vector<8x128xi32>
    %41 = arith.sitofp %40 : vector<8x128xi32> to vector<8x128xf32>
    %c0_18 = arith.constant 0 : index
    %c0_19 = arith.constant 0 : index
    %c0_20 = arith.constant 0 : index
    %42 = vector.load %arg10[%c0_18, %c0_19, %c0_20] : memref<1x8x1xf32, #tpu.memory_space<vmem>>, vector<1x8x1xf32>
    %43 = vector.shape_cast %42 : vector<1x8x1xf32> to vector<8x1xf32>
    %cst_21 = arith.constant dense<0.000000e+00> : vector<8x1xf32>
    %44 = tpu.matmul %41, %35, %cst_21 {dimension_numbers = #tpu.dot_dimension_numbers<[1], [0], [0], [1], [0, 0, 1, 1], [], []>} : vector<8x128xf32>, vector<128x1xf32>, vector<8x1xf32> -> vector<8x1xf32>
    %45 = arith.addf %43, %44 : vector<8x1xf32>
    %c0_22 = arith.constant 0 : index
    %c0_23 = arith.constant 0 : index
    %c0_24 = arith.constant 0 : index
    %46 = vector.load %arg10[%c0_22, %c0_23, %c0_24] : memref<1x8x1xf32, #tpu.memory_space<vmem>>, vector<1x8x1xf32>
    %47 = vector.shape_cast %46 : vector<1x8x1xf32> to vector<8x1xf32>
    %48 = vector.shape_cast %45 : vector<8x1xf32> to vector<1x8x1xf32>
    tpu.vector_store %arg10[%c0_22, %c0_23, %c0_24], %48 {strides = array<i32>} : memref<1x8x1xf32, #tpu.memory_space<vmem>>, vector<1x8x1xf32>,
    return
  }
  func.func @transform_0(%arg0: i32, %arg1: i32) -> (i32, i32) {
    %c1_i32 = arith.constant 1 : i32
    %0 = arith.muli %arg0, %c1_i32 : i32
    %1 = arith.addi %0, %arg1 : i32
    %c0_i32 = arith.constant 0 : i32
    %c0_i32_0 = arith.constant 0 : i32
    return %1, %c0_i32 : i32, i32
  }
  func.func @transform_1(%arg0: i32, %arg1: i32) -> (i32, i32) {
    %c1_i32 = arith.constant 1 : i32
    %0 = arith.muli %arg0, %c1_i32 : i32
    %1 = arith.addi %0, %arg1 : i32
    %c0_i32 = arith.constant 0 : i32
    %c0_i32_0 = arith.constant 0 : i32
    return %1, %c0_i32 : i32, i32
  }
  func.func @transform_2(%arg0: i32, %arg1: i32) -> (i32, i32) {
    %c1_i32 = arith.constant 1 : i32
    %0 = arith.muli %arg0, %c1_i32 : i32
    %1 = arith.addi %0, %arg1 : i32
    %c0_i32 = arith.constant 0 : i32
    %c0_i32_0 = arith.constant 0 : i32
    return %c0_i32, %1 : i32, i32
  }
  func.func @transform_3(%arg0: i32, %arg1: i32) -> (i32, i32) {
    %c0_i32 = arith.constant 0 : i32
    %c0_i32_0 = arith.constant 0 : i32
    %c0_i32_1 = arith.constant 0 : i32
    return %c0_i32, %c0_i32_0 : i32, i32
  }
  func.func @transform_4(%arg0: i32, %arg1: i32) -> (i32, i32) {
    %c0_i32 = arith.constant 0 : i32
    %c0_i32_0 = arith.constant 0 : i32
    %c0_i32_1 = arith.constant 0 : i32
    return %c0_i32, %c0_i32_0 : i32, i32
  }
  func.func @transform_5(%arg0: i32, %arg1: i32) -> (i32, i32) {
    %c0_i32 = arith.constant 0 : i32
    %c0_i32_0 = arith.constant 0 : i32
    %c0_i32_1 = arith.constant 0 : i32
    return %c0_i32, %c0_i32_0 : i32, i32
  }
  func.func @transform_6(%arg0: i32, %arg1: i32) -> (i32, i32) {
    %c0_i32 = arith.constant 0 : i32
    %c0_i32_0 = arith.constant 0 : i32
    %c0_i32_1 = arith.constant 0 : i32
    return %c0_i32, %c0_i32_0 : i32, i32
  }
  func.func @transform_7(%arg0: i32, %arg1: i32) -> i32 {
    %c0_i32 = arith.constant 0 : i32
    %c0_i32_0 = arith.constant 0 : i32
    return %c0_i32 : i32
  }
  func.func @transform_8(%arg0: i32, %arg1: i32) -> (i32, i32, i32) {
    %c0_i32 = arith.constant 0 : i32
    %c0_i32_0 = arith.constant 0 : i32
    %c0_i32_1 = arith.constant 0 : i32
    return %arg0, %c0_i32, %c0_i32_0 : i32, i32, i32
  }
}

</mosaic_0001>

<llo_original>
// kernel: tpu_custom_call.1
$region0: #{tpu_custom_call.1}
  #allocation0 [shape = 'u32[]', space=smem, size = 0x4, offset = 0x4, fixed_abs, tag = 'smem constant byte address 0x4 - core index']
  #allocation1 [shape = 'u32[144,128]{1,0:T(1,128)}', space=vmem, size = 0x12000, scoped, tag = 'internal scratch']
  %s0 = inlined_call_operand.vmem [shape: bf16[256,128], index: 0, kind: input, shape index: {}]
  %s1 = inlined_call_operand.vmem [shape: s8[256,1], index: 1, kind: input, shape index: {}]
  %s2 = inlined_call_operand.vmem [shape: s32[1,256], index: 2, kind: input, shape index: {}]
  %s3 = inlined_call_operand.vmem [shape: bf16[128,64], index: 3, kind: input, shape index: {}]
  %s4 = inlined_call_operand.vmem [shape: f32[1,64], index: 4, kind: input, shape index: {}]
  %s5 = inlined_call_operand.vmem [shape: f32[64,1], index: 5, kind: input, shape index: {}]
  %s6 = inlined_call_operand.vmem [shape: f32[16,1], index: 6, kind: input, shape index: {}]
  %s7 = inlined_call_operand.vmem [shape: f32[3], index: 7, kind: input, shape index: {}]
  %s8 = inlined_call_operand.vmem [shape: f32[2,8,1], index: 8, kind: output, shape index: {}]
  %s9 = sld [smem:[#allocation0]]
  $region73: #{tpu_custom_call.1} parent=0
    _
  %s11 = ssub.s32 1, %s9
  %s12 = scalar_select 0, %s11, %s9
  $region1: #{tpu_custom_call.1} parent=0
    #allocation2 [shape = 'u8[512]{0}', space=smem, size = 0x200, scoped, tag = 'input window, operand 7, single buffered']
    #allocation3 [shape = 's32[2]{0}', space=sflag, size = 0x8, scoped, tag = 'scoped memory for tpu_custom_call.1']
    %13 = vsyncpa [#allocation3], 0
    loop: start=0, step=1, limit=4
    $region2: #{tpu_custom_call.1} parent=1 // loop_pre_header
      _
    $region3: #{tpu_custom_call.1} parent=1 // loop_header
      %s15 = sphi 0, %s19
      %p16 = scmp.ge.s32.totalorder %s15, 4
      %s22 = sphi 0, %s34
      %s23 = sphi 0, %s30
      %s24 = sphi 0, %s22
      %s25 = sphi 0, %s23
      %s26 = sphi 0, %s24
      %s27 = sphi 0, %s25
      %s39 = sphi 0, %s41
      %s42 = sphi 0, %s39
      %s43 = sphi 0, %s42
      %s59 = sphi 0, %s43
      %s67 = sphi 0, %s69
      %s70 = sphi 0, %s67
      %s71 = sphi 0, %s70
      %s87 = sphi 0, %s71
      %s95 = sphi 0, %s97
      %s98 = sphi 0, %s95
      %s99 = sphi 0, %s98
      %s115 = sphi 0, %s99
      %s119 = sphi 0, %s119
      %s121 = sphi 0, %s119
      %s122 = sphi 0, %s121
      %s136 = sphi 0, %s122
      %s140 = sphi 0, %s140
      %s142 = sphi 0, %s140
      %s143 = sphi 0, %s142
      %s157 = sphi 0, %s143
      %s161 = sphi 0, %s161
      %s163 = sphi 0, %s161
      %s164 = sphi 0, %s163
      %s178 = sphi 0, %s164
      %s182 = sphi 0, %s182
      %s184 = sphi 0, %s182
      %s185 = sphi 0, %s184
      %s199 = sphi 0, %s185
      %s203 = sphi 0, %s203
      %s205 = sphi 0, %s203
      %s206 = sphi 0, %s205
      %s220 = sphi 0, %s206
      %s226 = sphi 0, %s228
      %s229 = sphi 0, %s226
      %s230 = sphi 0, %s229
      %s246 = sphi 0, %s230
    $region4: #{tpu_custom_call.1} parent=1 // loop_header_branch
      %18 = sbr.rel (%p16) target = $region8
    $region5: #{tpu_custom_call.1} parent=1 // loop_body
      %s20 = ssub.s32 %s15, 1
      %s21 = ssub.s32 %s15, 2
      %s28 = sadd.s32 1, %s23
      %p29 = scmp.ge.s32.totalorder %s28, 1
      %s30 = scalar_select %p29, 0, %s28
      %s31 = sadd.s32 1, %s22
      %s32 = scalar_select %p29, %s31, %s22
      %p33 = scmp.ge.s32.totalorder %s32, 2
      %s34 = scalar_select %p33, 0, %s32
      %s35 = sadd.s32 %s22, %s23
      %s36 = sadd.s32 %s34, %s30
      %s37 = ssub.s32 %s35, %s36
      %p38 = scmp.eq.s32.totalorder %s37, 0
      %s40 = sadd.s32 %s39, 1
      %s41 = scalar_select %p38, %s39, %s40
      %p44 = pneg %p38
      %p45 = scmp.eq.s32.totalorder %s15, 1
      %p46 = por %p44, %p45
      %p47 = scmp.ne.s32.totalorder %s39, %s42
      %p48 = scmp.eq.s32.totalorder %s15, 0
      %p49 = por %p47, %p48
      %p50 = scmp.ne.s32.totalorder %s39, %s42
      %p51 = scmp.eq.s32.totalorder %s20, 1
      %p52 = por %p50, %p51
      %p53 = scmp.ne.s32.totalorder %s42, %s43
      %p54 = scmp.eq.s32.totalorder %s20, 0
      %p55 = por %p53, %p54
      %p56 = scmp.ne.s32.totalorder %s42, %s43
      %p57 = scmp.eq.s32.totalorder %s21, 1
      %p58 = por %p56, %p57
      %p60 = scmp.ne.s32.totalorder %s43, %s59
      %p61 = scmp.eq.s32.totalorder %s21, 0
      %p62 = por %p60, %p61
      %s63 = sadd.s32 %s22, %s23
      %s64 = sadd.s32 %s34, %s30
      %s65 = ssub.s32 %s63, %s64
      %p66 = scmp.eq.s32.totalorder %s65, 0
      %s68 = sadd.s32 %s67, 1
      %s69 = scalar_select %p66, %s67, %s68
      %p72 = pneg %p66
      %p73 = scmp.eq.s32.totalorder %s15, 1
      %p74 = por %p72, %p73
      %p75 = scmp.ne.s32.totalorder %s67, %s70
      %p76 = scmp.eq.s32.totalorder %s15, 0
      %p77 = por %p75, %p76
      %p78 = scmp.ne.s32.totalorder %s67, %s70
      %p79 = scmp.eq.s32.totalorder %s20, 1
      %p80 = por %p78, %p79
      %p81 = scmp.ne.s32.totalorder %s70, %s71
      %p82 = scmp.eq.s32.totalorder %s20, 0
      %p83 = por %p81, %p82
      %p84 = scmp.ne.s32.totalorder %s70, %s71
      %p85 = scmp.eq.s32.totalorder %s21, 1
      %p86 = por %p84, %p85
      %p88 = scmp.ne.s32.totalorder %s71, %s87
      %p89 = scmp.eq.s32.totalorder %s21, 0
      %p90 = por %p88, %p89
      %s91 = sadd.s32 %s22, %s23
      %s92 = sadd.s32 %s34, %s30
      %s93 = ssub.s32 %s91, %s92
      %p94 = scmp.eq.s32.totalorder %s93, 0
      %s96 = sadd.s32 %s95, 1
      %s97 = scalar_select %p94, %s95, %s96
      %p100 = pneg %p94
      %p101 = scmp.eq.s32.totalorder %s15, 1
      %p102 = por %p100, %p101
      %p103 = scmp.ne.s32.totalorder %s95, %s98
      %p104 = scmp.eq.s32.totalorder %s15, 0
      %p105 = por %p103, %p104
      %p106 = scmp.ne.s32.totalorder %s95, %s98
      %p107 = scmp.eq.s32.totalorder %s20, 1
      %p108 = por %p106, %p107
      %p109 = scmp.ne.s32.totalorder %s98, %s99
      %p110 = scmp.eq.s32.totalorder %s20, 0
      %p111 = por %p109, %p110
      %p112 = scmp.ne.s32.totalorder %s98, %s99
      %p113 = scmp.eq.s32.totalorder %s21, 1
      %p114 = por %p112, %p113
      %p116 = scmp.ne.s32.totalorder %s99, %s115
      %p117 = scmp.eq.s32.totalorder %s21, 0
      %p118 = por %p116, %p117
      %s120 = sadd.s32 %s119, 1
      %p123 = scmp.eq.s32.totalorder %s15, 1
      %p124 = scmp.ne.s32.totalorder %s119, %s121
      %p125 = scmp.eq.s32.totalorder %s15, 0
      %p126 = por %p124, %p125
      %p127 = scmp.ne.s32.totalorder %s119, %s121
      %p128 = scmp.eq.s32.totalorder %s20, 1
      %p129 = por %p127, %p128
      %p130 = scmp.ne.s32.totalorder %s121, %s122
      %p131 = scmp.eq.s32.totalorder %s20, 0
      %p132 = por %p130, %p131
      %p133 = scmp.ne.s32.totalorder %s121, %s122
      %p134 = scmp.eq.s32.totalorder %s21, 1
      %p135 = por %p133, %p134
      %p137 = scmp.ne.s32.totalorder %s122, %s136
      %p138 = scmp.eq.s32.totalorder %s21, 0
      %p139 = por %p137, %p138
      %s141 = sadd.s32 %s140, 1
      %p144 = scmp.eq.s32.totalorder %s15, 1
      %p145 = scmp.ne.s32.totalorder %s140, %s142
      %p146 = scmp.eq.s32.totalorder %s15, 0
      %p147 = por %p145, %p146
      %p148 = scmp.ne.s32.totalorder %s140, %s142
      %p149 = scmp.eq.s32.totalorder %s20, 1
      %p150 = por %p148, %p149
      %p151 = scmp.ne.s32.totalorder %s142, %s143
      %p152 = scmp.eq.s32.totalorder %s20, 0
      %p153 = por %p151, %p152
      %p154 = scmp.ne.s32.totalorder %s142, %s143
      %p155 = scmp.eq.s32.totalorder %s21, 1
      %p156 = por %p154, %p155
      %p158 = scmp.ne.s32.totalorder %s143, %s157
      %p159 = scmp.eq.s32.totalorder %s21, 0
      %p160 = por %p158, %p159
      %s162 = sadd.s32 %s161, 1
      %p165 = scmp.eq.s32.totalorder %s15, 1
      %p166 = scmp.ne.s32.totalorder %s161, %s163
      %p167 = scmp.eq.s32.totalorder %s15, 0
      %p168 = por %p166, %p167
      %p169 = scmp.ne.s32.totalorder %s161, %s163
      %p170 = scmp.eq.s32.totalorder %s20, 1
      %p171 = por %p169, %p170
      %p172 = scmp.ne.s32.totalorder %s163, %s164
      %p173 = scmp.eq.s32.totalorder %s20, 0
      %p174 = por %p172, %p173
      %p175 = scmp.ne.s32.totalorder %s163, %s164
      %p176 = scmp.eq.s32.totalorder %s21, 1
      %p177 = por %p175, %p176
      %p179 = scmp.ne.s32.totalorder %s164, %s178
      %p180 = scmp.eq.s32.totalorder %s21, 0
      %p181 = por %p179, %p180
      %s183 = sadd.s32 %s182, 1
      %p186 = scmp.eq.s32.totalorder %s15, 1
      %p187 = scmp.ne.s32.totalorder %s182, %s184
      %p188 = scmp.eq.s32.totalorder %s15, 0
      %p189 = por %p187, %p188
      %p190 = scmp.ne.s32.totalorder %s182, %s184
      %p191 = scmp.eq.s32.totalorder %s20, 1
      %p192 = por %p190, %p191
      %p193 = scmp.ne.s32.totalorder %s184, %s185
      %p194 = scmp.eq.s32.totalorder %s20, 0
      %p195 = por %p193, %p194
      %p196 = scmp.ne.s32.totalorder %s184, %s185
      %p197 = scmp.eq.s32.totalorder %s21, 1
      %p198 = por %p196, %p197
      %p200 = scmp.ne.s32.totalorder %s185, %s199
      %p201 = scmp.eq.s32.totalorder %s21, 0
      %p202 = por %p200, %p201
      %s204 = sadd.s32 %s203, 1
      %p207 = scmp.eq.s32.totalorder %s15, 1
      %p208 = scmp.ne.s32.totalorder %s203, %s205
      %p209 = scmp.eq.s32.totalorder %s15, 0
      %p210 = por %p208, %p209
      %p211 = scmp.ne.s32.totalorder %s203, %s205
      %p212 = scmp.eq.s32.totalorder %s20, 1
      %p213 = por %p211, %p212
      %p214 = scmp.ne.s32.totalorder %s205, %s206
      %p215 = scmp.eq.s32.totalorder %s20, 0
      %p216 = por %p214, %p215
      %p217 = scmp.ne.s32.totalorder %s205, %s206
      %p218 = scmp.eq.s32.totalorder %s21, 1
      %p219 = por %p217, %p218
      %p221 = scmp.ne.s32.totalorder %s206, %s220
      %p222 = scmp.eq.s32.totalorder %s21, 0
      %p223 = por %p221, %p222
      %s224 = ssub.s32 %s22, %s34
      %p225 = scmp.eq.s32.totalorder %s224, 0
      %s227 = sadd.s32 %s226, 1
      %s228 = scalar_select %p225, %s226, %s227
      %p231 = pneg %p225
      %p232 = scmp.eq.s32.totalorder %s15, 1
      %p233 = por %p231, %p232
      %p234 = scmp.ne.s32.totalorder %s226, %s229
      %p235 = scmp.eq.s32.totalorder %s15, 0
      %p236 = por %p234, %p235
      %p237 = scmp.ne.s32.totalorder %s226, %s229
      %p238 = scmp.eq.s32.totalorder %s20, 1
      %p239 = por %p237, %p238
      %p240 = scmp.ne.s32.totalorder %s229, %s230
      %p241 = scmp.eq.s32.totalorder %s20, 0
      %p242 = por %p240, %p241
      %p243 = scmp.ne.s32.totalorder %s229, %s230
      %p244 = scmp.eq.s32.totalorder %s21, 1
      %p245 = por %p243, %p244
      %p247 = scmp.ne.s32.totalorder %s230, %s246
      %p248 = scmp.eq.s32.totalorder %s21, 0
      %p249 = por %p247, %p248
      %p250 = scmp.le.s32.totalorder 1, %s15
      %p251 = scmp.lt.s32.totalorder %s15, 3
      %p252 = pnand %p250, %p251
      %p253 = pneg %p252
      // Predicated region
      $region9: #{tpu_custom_call.1} parent=5 // pred_check
        _
      $region10: #{tpu_custom_call.1} parent=5 // pred_check_branch
        %255 = sbr.rel (%p252) target = $region12
      $region11: #{tpu_custom_call.1} parent=5 // pred_region
        %s256 = ssub.s32 %s15, 1
        // Predicated region
        $region13: #{tpu_custom_call.1} parent=11 // pred_check
          %p257 = pneg %p132
        $region14: #{tpu_custom_call.1} parent=11 // pred_check_branch
          %259 = sbr.rel (%p257) target = $region16
        $region15: #{tpu_custom_call.1} parent=11 // pred_region
          _
        $region16: #{tpu_custom_call.1} parent=11 // pred_fallthru
          _
        // Predicated region
        $region17: #{tpu_custom_call.1} parent=11 // pred_check
          %p260 = pneg %p153
        $region18: #{tpu_custom_call.1} parent=11 // pred_check_branch
          %262 = sbr.rel (%p260) target = $region20
        $region19: #{tpu_custom_call.1} parent=11 // pred_region
          _
        $region20: #{tpu_custom_call.1} parent=11 // pred_fallthru
          _
        // Predicated region
        $region21: #{tpu_custom_call.1} parent=11 // pred_check
          %p263 = pneg %p174
        $region22: #{tpu_custom_call.1} parent=11 // pred_check_branch
          %265 = sbr.rel (%p263) target = $region24
        $region23: #{tpu_custom_call.1} parent=11 // pred_region
          _
        $region24: #{tpu_custom_call.1} parent=11 // pred_fallthru
          _
        // Predicated region
        $region25: #{tpu_custom_call.1} parent=11 // pred_check
          %p266 = pneg %p195
        $region26: #{tpu_custom_call.1} parent=11 // pred_check_branch
          %268 = sbr.rel (%p266) target = $region28
        $region27: #{tpu_custom_call.1} parent=11 // pred_region
          _
        $region28: #{tpu_custom_call.1} parent=11 // pred_fallthru
          _
        // Predicated region
        $region29: #{tpu_custom_call.1} parent=11 // pred_check
          %p269 = pneg %p216
        $region30: #{tpu_custom_call.1} parent=11 // pred_check_branch
          %271 = sbr.rel (%p269) target = $region32
        $region31: #{tpu_custom_call.1} parent=11 // pred_region
          %s273 = ssub.s32 16, 16
          %274 = vsyncadd [#allocation3], %s273
          %s276 = sshll.u32 %s7, 4
          %s277 = int_to_ptr.vmem [resolvable:$true] %s276
          %279 = dma.vmem_to_smem %s277, 16, [#allocation2], [#allocation3]
        $region32: #{tpu_custom_call.1} parent=11 // pred_fallthru
          _
      $region12: #{tpu_custom_call.1} parent=5 // pred_fallthru
        _
      %p280 = scmp.lt.s32.totalorder %s15, 2
      // Predicated region
      $region33: #{tpu_custom_call.1} parent=5 // pred_check
        %p281 = pneg %p280
      $region34: #{tpu_custom_call.1} parent=5 // pred_check_branch
        %283 = sbr.rel (%p281) target = $region36
      $region35: #{tpu_custom_call.1} parent=5 // pred_region
        // Predicated region
        $region37: #{tpu_custom_call.1} parent=35 // pred_check
          %p284 = pneg %p49
        $region38: #{tpu_custom_call.1} parent=35 // pred_check_branch
          %286 = sbr.rel (%p284) target = $region40
        $region39: #{tpu_custom_call.1} parent=35 // pred_region
          %s287 = sadd.s32 %s22, %s23
          %s288 = smul.u32 16, %s287
          %p289 = scmp.lt.s32.totalorder %s288, 31
          %s290 = scalar_select %p289, %s288, 31
          %s291 = smul.addr %s290, 4
          %s292 = scalar_lea.vmem %s0, %s291
          %s293 = sadd.s32 %s22, %s23
          %s294 = smul.u32 16, %s293
        $region40: #{tpu_custom_call.1} parent=35 // pred_fallthru
          _
        // Predicated region
        $region41: #{tpu_custom_call.1} parent=35 // pred_check
          %p295 = pneg %p77
        $region42: #{tpu_custom_call.1} parent=35 // pred_check_branch
          %297 = sbr.rel (%p295) target = $region44
        $region43: #{tpu_custom_call.1} parent=35 // pred_region
          %s298 = sadd.s32 %s22, %s23
          %s299 = smul.u32 16, %s298
          %p300 = scmp.lt.s32.totalorder %s299, 31
          %s301 = scalar_select %p300, %s299, 31
          %s302 = smul.addr %s301, 2
          %s303 = scalar_lea.vmem %s1, %s302
          %s304 = sadd.s32 %s22, %s23
          %s305 = smul.u32 16, %s304
        $region44: #{tpu_custom_call.1} parent=35 // pred_fallthru
          _
        // Predicated region
        $region45: #{tpu_custom_call.1} parent=35 // pred_check
          %p306 = pneg %p105
        $region46: #{tpu_custom_call.1} parent=35 // pred_check_branch
          %308 = sbr.rel (%p306) target = $region48
        $region47: #{tpu_custom_call.1} parent=35 // pred_region
          %s309 = sadd.s32 %s22, %s23
          %p310 = scmp.lt.s32.totalorder %s309, 1
          %s311 = scalar_select %p310, %s309, 1
          %s312 = scalar_lea.vmem %s2, %s311
          %s313 = sadd.s32 %s22, %s23
        $region48: #{tpu_custom_call.1} parent=35 // pred_fallthru
          _
      $region36: #{tpu_custom_call.1} parent=5 // pred_fallthru
        _
      %p314 = scmp.le.s32.totalorder 1, %s15
      %p315 = scmp.lt.s32.totalorder %s15, 3
      %p316 = pnand %p314, %p315
      %p317 = pneg %p316
      // Predicated region
      $region49: #{tpu_custom_call.1} parent=5 // pred_check
        _
      $region50: #{tpu_custom_call.1} parent=5 // pred_check_branch
        %319 = sbr.rel (%p316) target = $region52
      $region51: #{tpu_custom_call.1} parent=5 // pred_region
        %s320 = ssub.s32 %s15, 1
        // Predicated region
        $region53: #{tpu_custom_call.1} parent=51 // pred_check
          %p321 = pneg %p216
        $region54: #{tpu_custom_call.1} parent=51 // pred_check_branch
          %323 = sbr.rel (%p321) target = $region56
        $region55: #{tpu_custom_call.1} parent=51 // pred_region
          %324 = dma.done [#allocation3], 16
        $region56: #{tpu_custom_call.1} parent=51 // pred_fallthru
          _
        %325 = sfence
        %s326 = sadd.s32 %s24, %s25
        %s327 = smul.u32 16, %s326
        %p328 = scmp.lt.s32.totalorder %s327, 31
        %s329 = scalar_select %p328, %s327, 31
        %s330 = smul.addr %s329, 4
        %s331 = scalar_lea.vmem %s0, %s330
        %p332 = pneg %p55
        %p333 = pneg %p52
        %s334 = sadd.s32 %s24, %s25
        %s335 = smul.u32 16, %s334
        %p336 = scmp.lt.s32.totalorder %s335, 31
        %s337 = scalar_select %p336, %s335, 31
        %s338 = smul.addr %s337, 2
        %s339 = scalar_lea.vmem %s1, %s338
        %p340 = pneg %p83
        %p341 = pneg %p80
        %s342 = sadd.s32 %s24, %s25
        %p343 = scmp.lt.s32.totalorder %s342, 1
        %s344 = scalar_select %p343, %s342, 1
        %s345 = scalar_lea.vmem %s2, %s344
        %p346 = pneg %p111
        %p347 = pneg %p108
        %p348 = pneg %p132
        %p349 = pneg %p129
        %p350 = pneg %p153
        %p351 = pneg %p150
        %p352 = pneg %p174
        %p353 = pneg %p171
        %p354 = pneg %p195
        %p355 = pneg %p192
        %p356 = pneg %p216
        %p357 = pneg %p213
        %p358 = pneg %p242
        %p359 = pneg %p239
        %p360 = scmp.lt.s32.totalorder %s24, 1
        %s361 = scalar_select %p360, %s24, 1
        %s362 = smul.addr %s361, 8
        %s363 = scalar_lea.vmem %s8, %s362
        %s364 = sadd.s32 %s24, %s25
        %s365 = smul.u32 16, %s364
        %p366 = scmp.lt.s32.totalorder %s365, 31
        %s367 = scalar_select %p366, %s365, 31
        %s368 = smul.addr %s367, 4
        %s369 = scalar_lea.vmem %s0, %s368
        %s370 = sadd.s32 %s24, %s25
        %s371 = smul.u32 16, %s370
        %s372 = sadd.s32 %s24, %s25
        %s373 = smul.u32 16, %s372
        %p374 = scmp.lt.s32.totalorder %s373, 31
        %s375 = scalar_select %p374, %s373, 31
        %s376 = smul.addr %s375, 2
        %s377 = scalar_lea.vmem %s1, %s376
        %s378 = sadd.s32 %s24, %s25
        %s379 = smul.u32 16, %s378
        %s380 = sadd.s32 %s24, %s25
        %p381 = scmp.lt.s32.totalorder %s380, 1
        %s382 = scalar_select %p381, %s380, 1
        %s383 = scalar_lea.vmem %s2, %s382
        %s384 = sadd.s32 %s24, %s25
        %p385 = scmp.lt.s32.totalorder %s24, 1
        %s386 = scalar_select %p385, %s24, 1
        %s387 = smul.addr %s386, 8
        %s388 = scalar_lea.vmem %s8, %s387
        %p390 = scmp.eq.s32.totalorder %s25, 0
        // Predicated region
        $region57: #{tpu_custom_call.1} parent=51 // pred_check
          %p391 = pneg %p390
        $region58: #{tpu_custom_call.1} parent=51 // pred_check_branch
          %393 = sbr.rel (%p391) target = $region60
        $region59: #{tpu_custom_call.1} parent=51 // pred_region
          %vm394 = vcmask 7168
          %395 = vst.msk [vmem:[%s388] sm:$0xff] %vm394, 0.0
        $region60: #{tpu_custom_call.1} parent=51 // pred_fallthru
          _
        %v396 = vld [vmem:[%s369] sm:$0xf]
        %v397 = vld [vmem:[%s369 + $0x4] sm:$0xf]
        %v398 = vld [vmem:[%s369 + $0x8] sm:$0xf]
        %v399 = vld [vmem:[%s369 + $0xc] sm:$0xf]
        %v400 = vld [vmem:[%s369 + $0x10] sm:$0xf]
        %v401 = vld [vmem:[%s369 + $0x14] sm:$0xf]
        %v402 = vld [vmem:[%s369 + $0x18] sm:$0xf]
        %v403 = vld [vmem:[%s369 + $0x1c] sm:$0xf]
        %v404 = vld [vmem:[%s369 + $0x20] sm:$0xf]
        %v405 = vld [vmem:[%s369 + $0x24] sm:$0xf]
        %v406 = vld [vmem:[%s369 + $0x28] sm:$0xf]
        %v407 = vld [vmem:[%s369 + $0x2c] sm:$0xf]
        %v408 = vld [vmem:[%s369 + $0x30] sm:$0xf]
        %v409 = vld [vmem:[%s369 + $0x34] sm:$0xf]
        %v410 = vld [vmem:[%s369 + $0x38] sm:$0xf]
        %v411 = vld [vmem:[%s369 + $0x3c] sm:$0xf]
        %v412 = vld [vmem:[%s3] sm:$0xf]
        %v413 = vld [vmem:[%s3 + $0x4] sm:$0xf]
        %v414 = vld [vmem:[%s3 + $0x8] sm:$0xf]
        %v415 = vld [vmem:[%s3 + $0xc] sm:$0xf]
        %v416 = vld [vmem:[%s3 + $0x10] sm:$0xf]
        %v417 = vld [vmem:[%s3 + $0x14] sm:$0xf]
        %v418 = vld [vmem:[%s3 + $0x18] sm:$0xf]
        %v419 = vld [vmem:[%s3 + $0x1c] sm:$0xf]
        %v420 = vld [vmem:[%s3 + $0x20] sm:$0xf]
        %v421 = vld [vmem:[%s3 + $0x24] sm:$0xf]
        %v422 = vld [vmem:[%s3 + $0x28] sm:$0xf]
        %v423 = vld [vmem:[%s3 + $0x2c] sm:$0xf]
        %v424 = vld [vmem:[%s3 + $0x30] sm:$0xf]
        %v425 = vld [vmem:[%s3 + $0x34] sm:$0xf]
        %v426 = vld [vmem:[%s3 + $0x38] sm:$0xf]
        %v427 = vld [vmem:[%s3 + $0x3c] sm:$0xf]
        %v428 = vld [vmem:[%s4] sm:$0x1]
        %v430 = vlaneseq
        %v431 = vshrl.u32 %v430, 7
        %v432 = vsub.s32 0, %v431
        %v433 = vrot.slane %v428, %v432
        %v451 = vunpack.c.l.b16 %v396
        %v452 = vunpack.c.l.b16 %v397
        %v453 = vunpack.c.l.b16 %v398
        %v454 = vunpack.c.l.b16 %v399
        %v455 = vunpack.c.l.b16 %v400
        %v456 = vunpack.c.l.b16 %v401
        %v457 = vunpack.c.l.b16 %v402
        %v458 = vunpack.c.l.b16 %v403
        %v459 = vunpack.c.l.b16 %v404
        %v460 = vunpack.c.l.b16 %v405
        %v461 = vunpack.c.l.b16 %v406
        %v462 = vunpack.c.l.b16 %v407
        %v463 = vunpack.c.l.b16 %v408
        %v464 = vunpack.c.l.b16 %v409
        %v465 = vunpack.c.l.b16 %v410
        %v466 = vunpack.c.l.b16 %v411
        %v467 = vpack.c.b16 %v452, %v451
        %v468 = vpack.c.b16 %v454, %v453
        %v469 = vpack.c.b16 %v456, %v455
        %v470 = vpack.c.b16 %v458, %v457
        %v471 = vpack.c.b16 %v460, %v459
        %v472 = vpack.c.b16 %v462, %v461
        %v473 = vpack.c.b16 %v464, %v463
        %v474 = vpack.c.b16 %v466, %v465
        %v499 = vunpack.c.l.b16 %v412
        %v500 = vunpack.c.l.b16 %v413
        %v501 = vunpack.c.l.b16 %v414
        %v502 = vunpack.c.l.b16 %v415
        %v503 = vunpack.c.l.b16 %v416
        %v504 = vunpack.c.l.b16 %v417
        %v505 = vunpack.c.l.b16 %v418
        %v506 = vunpack.c.l.b16 %v419
        %v507 = vunpack.c.l.b16 %v420
        %v508 = vunpack.c.l.b16 %v421
        %v509 = vunpack.c.l.b16 %v422
        %v510 = vunpack.c.l.b16 %v423
        %v511 = vunpack.c.l.b16 %v424
        %v512 = vunpack.c.l.b16 %v425
        %v513 = vunpack.c.l.b16 %v426
        %v514 = vunpack.c.l.b16 %v427
        %v515 = vpack.c.b16 %v500, %v499
        %v516 = vpack.c.b16 %v502, %v501
        %v517 = vpack.c.b16 %v504, %v503
        %v518 = vpack.c.b16 %v506, %v505
        %v519 = vpack.c.b16 %v508, %v507
        %v520 = vpack.c.b16 %v510, %v509
        %v521 = vpack.c.b16 %v512, %v511
        %v522 = vpack.c.b16 %v514, %v513
        %531 = vmatprep.subr.bf16.mxu0 0
        %532 = vmatpush1.bf16.msra.mxu0 %v515
        %533 = vmatprep.subr.bf16.mxu0 0
        %534 = vmatpush1.bf16.msra.mxu0 %v516
        %535 = vmatprep.subr.bf16.mxu0 0
        %536 = vmatpush1.bf16.msra.mxu0 %v517
        %537 = vmatprep.subr.bf16.mxu0 0
        %538 = vmatpush1.bf16.msra.mxu0 %v518
        %539 = vmatprep.subr.bf16.mxu0 0
        %540 = vmatpush1.bf16.msra.mxu0 %v519
        %541 = vmatprep.subr.bf16.mxu0 0
        %542 = vmatpush1.bf16.msra.mxu0 %v520
        %543 = vmatprep.subr.bf16.mxu0 0
        %544 = vmatpush1.bf16.msra.mxu0 %v521
        %545 = vmatprep.subr.bf16.mxu0 0
        %546 = vmatpush1.bf16.msra.mxu0 %v522
        %547 = vmatprep.subr.bf16.mxu0 0
        %548 = vmatpush1.bf16.msra.mxu0 0
        %549 = vmatprep.subr.bf16.mxu0 0
        %550 = vmatpush1.bf16.msra.mxu0 0
        %551 = vmatprep.subr.bf16.mxu0 0
        %552 = vmatpush1.bf16.msra.mxu0 0
        %553 = vmatprep.subr.bf16.mxu0 0
        %554 = vmatpush1.bf16.msra.mxu0 0
        %555 = vmatprep.subr.bf16.mxu0 0
        %556 = vmatpush1.bf16.msra.mxu0 0
        %557 = vmatprep.subr.bf16.mxu0 0
        %558 = vmatpush1.bf16.msra.mxu0 0
        %559 = vmatprep.subr.bf16.mxu0 0
        %560 = vmatpush1.bf16.msra.mxu0 0
        %561 = vmatprep.subr.bf16.mxu0 0
        %562 = vmatpush1.bf16.msra.mxu0 0
        %563 = vmatprep.mubr.bf16.mxu0 0
        %564 = vmatmul.mubr.bf16.gmra.mrb[0].mxu0 %v467
        %v565 = vpop.f32.mrb[0].mxu0
        %v566 = vadd.f32 %v433, %v565
        %v567 = vpop.f32.mrb[0].mxu0
        %v568 = vpop.f32.mrb[0].mxu0
        %v569 = vadd.f32 %v433, %v568
        %v570 = vpop.f32.mrb[0].mxu0
        %571 = vmatprep.mubr.bf16.mxu0 0
        %572 = vmatmul.mubr.bf16.gmra.mrb[0].mxu0 %v468
        %v573 = vpop.f32.mrb[0].mxu0
        %v574 = vadd.f32 %v433, %v573
        %v575 = vpop.f32.mrb[0].mxu0
        %v576 = vpop.f32.mrb[0].mxu0
        %v577 = vadd.f32 %v433, %v576
        %v578 = vpop.f32.mrb[0].mxu0
        %579 = vmatprep.mubr.bf16.mxu0 0
        %580 = vmatmul.mubr.bf16.gmra.mrb[0].mxu0 %v469
        %v581 = vpop.f32.mrb[0].mxu0
        %v582 = vadd.f32 %v433, %v581
        %v583 = vpop.f32.mrb[0].mxu0
        %v584 = vpop.f32.mrb[0].mxu0
        %v585 = vadd.f32 %v433, %v584
        %v586 = vpop.f32.mrb[0].mxu0
        %587 = vmatprep.mubr.bf16.mxu0 0
        %588 = vmatmul.mubr.bf16.gmra.mrb[0].mxu0 %v470
        %v589 = vpop.f32.mrb[0].mxu0
        %v590 = vadd.f32 %v433, %v589
        %v591 = vpop.f32.mrb[0].mxu0
        %v592 = vpop.f32.mrb[0].mxu0
        %v593 = vadd.f32 %v433, %v592
        %v594 = vpop.f32.mrb[0].mxu0
        %595 = vmatprep.mubr.bf16.mxu0 0
        %596 = vmatmul.mubr.bf16.gmra.mrb[0].mxu0 %v471
        %v597 = vpop.f32.mrb[0].mxu0
        %v598 = vadd.f32 %v433, %v597
        %v599 = vpop.f32.mrb[0].mxu0
        %v600 = vpop.f32.mrb[0].mxu0
        %v601 = vadd.f32 %v433, %v600
        %v602 = vpop.f32.mrb[0].mxu0
        %603 = vmatprep.mubr.bf16.mxu0 0
        %604 = vmatmul.mubr.bf16.gmra.mrb[0].mxu0 %v472
        %v605 = vpop.f32.mrb[0].mxu0
        %v606 = vadd.f32 %v433, %v605
        %v607 = vpop.f32.mrb[0].mxu0
        %v608 = vpop.f32.mrb[0].mxu0
        %v609 = vadd.f32 %v433, %v608
        %v610 = vpop.f32.mrb[0].mxu0
        %611 = vmatprep.mubr.bf16.mxu0 0
        %612 = vmatmul.mubr.bf16.gmra.mrb[0].mxu0 %v473
        %v613 = vpop.f32.mrb[0].mxu0
        %v614 = vadd.f32 %v433, %v613
        %v615 = vpop.f32.mrb[0].mxu0
        %v616 = vpop.f32.mrb[0].mxu0
        %v617 = vadd.f32 %v433, %v616
        %v618 = vpop.f32.mrb[0].mxu0
        %619 = vmatprep.mubr.bf16.mxu0 0
        %620 = vmatmul.mubr.bf16.gmra.mrb[0].mxu0 %v474
        %v621 = vpop.f32.mrb[0].mxu0
        %v622 = vadd.f32 %v433, %v621
        %v623 = vpop.f32.mrb[0].mxu0
        %v624 = vpop.f32.mrb[0].mxu0
        %v625 = vadd.f32 %v433, %v624
        %v626 = vpop.f32.mrb[0].mxu0
        %627 = vdwg.mxu0
        %v628 = vxor.u32 %v566, 2147483648
        %v629 = vxor.u32 %v569, 2147483648
        %v630 = vxor.u32 %v574, 2147483648
        %v631 = vxor.u32 %v577, 2147483648
        %v632 = vxor.u32 %v582, 2147483648
        %v633 = vxor.u32 %v585, 2147483648
        %v634 = vxor.u32 %v590, 2147483648
        %v635 = vxor.u32 %v593, 2147483648
        %v636 = vxor.u32 %v598, 2147483648
        %v637 = vxor.u32 %v601, 2147483648
        %v638 = vxor.u32 %v606, 2147483648
        %v639 = vxor.u32 %v609, 2147483648
        %v640 = vxor.u32 %v614, 2147483648
        %v641 = vxor.u32 %v617, 2147483648
        %v642 = vxor.u32 %v622, 2147483648
        %v643 = vxor.u32 %v625, 2147483648
        %v644 = vmul.f32 %v628, 1.442695
        %v645 = vpow.pop %v644
        %v646 = vmul.f32 %v629, 1.442695
        %v647 = vpow.pop %v646
        %v648 = vmul.f32 %v630, 1.442695
        %v649 = vpow.pop %v648
        %v650 = vmul.f32 %v631, 1.442695
        %v651 = vpow.pop %v650
        %v652 = vmul.f32 %v632, 1.442695
        %v653 = vpow.pop %v652
        %v654 = vmul.f32 %v633, 1.442695
        %v655 = vpow.pop %v654
        %v656 = vmul.f32 %v634, 1.442695
        %v657 = vpow.pop %v656
        %v658 = vmul.f32 %v635, 1.442695
        %v659 = vpow.pop %v658
        %v660 = vmul.f32 %v636, 1.442695
        %v661 = vpow.pop %v660
        %v662 = vmul.f32 %v637, 1.442695
        %v663 = vpow.pop %v662
        %v664 = vmul.f32 %v638, 1.442695
        %v665 = vpow.pop %v664
        %v666 = vmul.f32 %v639, 1.442695
        %v667 = vpow.pop %v666
        %v668 = vmul.f32 %v640, 1.442695
        %v669 = vpow.pop %v668
        %v670 = vmul.f32 %v641, 1.442695
        %v671 = vpow.pop %v670
        %v672 = vmul.f32 %v642, 1.442695
        %v673 = vpow.pop %v672
        %v674 = vmul.f32 %v643, 1.442695
        %v675 = vpow.pop %v674
        %v676 = vadd.f32 %v645, 1.0
        %v677 = vadd.f32 %v647, 1.0
        %v678 = vadd.f32 %v649, 1.0
        %v679 = vadd.f32 %v651, 1.0
        %v680 = vadd.f32 %v653, 1.0
        %v681 = vadd.f32 %v655, 1.0
        %v682 = vadd.f32 %v657, 1.0
        %v683 = vadd.f32 %v659, 1.0
        %v684 = vadd.f32 %v661, 1.0
        %v685 = vadd.f32 %v663, 1.0
        %v686 = vadd.f32 %v665, 1.0
        %v687 = vadd.f32 %v667, 1.0
        %v688 = vadd.f32 %v669, 1.0
        %v689 = vadd.f32 %v671, 1.0
        %v690 = vadd.f32 %v673, 1.0
        %v691 = vadd.f32 %v675, 1.0
        %v692 = vrcp.pop %v676
        %v693 = vmul.f32 1.0, %v692
        %v694 = vrcp.pop %v677
        %v695 = vmul.f32 1.0, %v694
        %v696 = vrcp.pop %v678
        %v697 = vmul.f32 1.0, %v696
        %v698 = vrcp.pop %v679
        %v699 = vmul.f32 1.0, %v698
        %v700 = vrcp.pop %v680
        %v701 = vmul.f32 1.0, %v700
        %v702 = vrcp.pop %v681
        %v703 = vmul.f32 1.0, %v702
        %v704 = vrcp.pop %v682
        %v705 = vmul.f32 1.0, %v704
        %v706 = vrcp.pop %v683
        %v707 = vmul.f32 1.0, %v706
        %v708 = vrcp.pop %v684
        %v709 = vmul.f32 1.0, %v708
        %v710 = vrcp.pop %v685
        %v711 = vmul.f32 1.0, %v710
        %v712 = vrcp.pop %v686
        %v713 = vmul.f32 1.0, %v712
        %v714 = vrcp.pop %v687
        %v715 = vmul.f32 1.0, %v714
        %v716 = vrcp.pop %v688
        %v717 = vmul.f32 1.0, %v716
        %v718 = vrcp.pop %v689
        %v719 = vmul.f32 1.0, %v718
        %v720 = vrcp.pop %v690
        %v721 = vmul.f32 1.0, %v720
        %v722 = vrcp.pop %v691
        %v723 = vmul.f32 1.0, %v722
        %v724 = vmul.f32 %v566, %v693
        %v725 = vmul.f32 %v569, %v695
        %v726 = vmul.f32 %v574, %v697
        %v727 = vmul.f32 %v577, %v699
        %v728 = vmul.f32 %v582, %v701
        %v729 = vmul.f32 %v585, %v703
        %v730 = vmul.f32 %v590, %v705
        %v731 = vmul.f32 %v593, %v707
        %v732 = vmul.f32 %v598, %v709
        %v733 = vmul.f32 %v601, %v711
        %v734 = vmul.f32 %v606, %v713
        %v735 = vmul.f32 %v609, %v715
        %v736 = vmul.f32 %v614, %v717
        %v737 = vmul.f32 %v617, %v719
        %v738 = vmul.f32 %v622, %v721
        %v739 = vmul.f32 %v625, %v723
        %s740 = sld [smem:[#allocation2]]
        %s741 = sld [smem:[#allocation2 + $0x1]]
        %s742 = sld [smem:[#allocation2 + $0x2]]
        %v743 = vld [vmem:[%s5] sm:$0xff]
        %v744 = vld [vmem:[%s5 + $0x8] sm:$0xff]
        %v745 = vld [vmem:[%s5 + $0x10] sm:$0xff]
        %v746 = vld [vmem:[%s5 + $0x18] sm:$0xff]
        %v747 = vld [vmem:[%s5 + $0x20] sm:$0xff]
        %v748 = vld [vmem:[%s5 + $0x28] sm:$0xff]
        %v749 = vld [vmem:[%s5 + $0x30] sm:$0xff]
        %v750 = vld [vmem:[%s5 + $0x38] sm:$0xff]
        %v751 = vstv %s742
        %vm752 = vcmask 523264
        %v754 = vsel %vm752, %v724, 0
        %v757 = vsel %vm752, %v725, 0
        %v760 = vsel %vm752, %v726, 0
        %v763 = vsel %vm752, %v727, 0
        %v766 = vsel %vm752, %v728, 0
        %v769 = vsel %vm752, %v729, 0
        %v772 = vsel %vm752, %v730, 0
        %v775 = vsel %vm752, %v731, 0
        %v778 = vsel %vm752, %v732, 0
        %v781 = vsel %vm752, %v733, 0
        %v784 = vsel %vm752, %v734, 0
        %v787 = vsel %vm752, %v735, 0
        %v790 = vsel %vm752, %v736, 0
        %v793 = vsel %vm752, %v737, 0
        %v796 = vsel %vm752, %v738, 0
        %v799 = vsel %vm752, %v739, 0
        %801 = vmatprep.subr.mxu0 0.0
        %802 = vmatpush1.msra.mxu0 %v743
        %803 = vmatprep.subr.mxu0 0.0
        %804 = vmatpush1.msra.mxu0 %v744
        %805 = vmatprep.subr.mxu0 0.0
        %806 = vmatpush1.msra.mxu0 %v745
        %807 = vmatprep.subr.mxu0 0.0
        %808 = vmatpush1.msra.mxu0 %v746
        %809 = vmatprep.subr.mxu0 0.0
        %810 = vmatpush1.msra.mxu0 %v747
        %811 = vmatprep.subr.mxu0 0.0
        %812 = vmatpush1.msra.mxu0 %v748
        %813 = vmatprep.subr.mxu0 0.0
        %814 = vmatpush1.msra.mxu0 %v749
        %815 = vmatprep.subr.mxu0 0.0
        %816 = vmatpush1.msra.mxu0 %v750
        %817 = vmatprep.subr.mxu0 0.0
        %818 = vmatpush1.msra.mxu0 0.0
        %819 = vmatprep.subr.mxu0 0.0
        %820 = vmatpush1.msra.mxu0 0.0
        %821 = vmatprep.subr.mxu0 0.0
        %822 = vmatpush1.msra.mxu0 0.0
        %823 = vmatprep.subr.mxu0 0.0
        %824 = vmatpush1.msra.mxu0 0.0
        %825 = vmatprep.subr.mxu0 0.0
        %826 = vmatpush1.msra.mxu0 0.0
        %827 = vmatprep.subr.mxu0 0.0
        %828 = vmatpush1.msra.mxu0 0.0
        %829 = vmatprep.subr.mxu0 0.0
        %830 = vmatpush1.msra.mxu0 0.0
        %831 = vmatprep.subr.mxu0 0.0
        %832 = vmatpush1.msra.mxu0 0.0
        %833 = vmatprep.subr.mxu0 0.0
        %834 = vmatpush1.msra.mxu0 0.0
        %835 = vmatprep.subr.mxu0 0.0
        %836 = vmatpush1.msra.mxu0 0.0
        %837 = vmatprep.subr.mxu0 0.0
        %838 = vmatpush1.msra.mxu0 0.0
        %839 = vmatprep.subr.mxu0 0.0
        %840 = vmatpush1.msra.mxu0 0.0
        %841 = vmatprep.subr.mxu0 0.0
        %842 = vmatpush1.msra.mxu0 0.0
        %843 = vmatprep.subr.mxu0 0.0
        %844 = vmatpush1.msra.mxu0 0.0
        %845 = vmatprep.subr.mxu0 0.0
        %846 = vmatpush1.msra.mxu0 0.0
        %847 = vmatprep.subr.mxu0 0.0
        %848 = vmatpush1.msra.mxu0 0.0
        %849 = vmatprep.subr.mxu0 0.0
        %850 = vmatpush1.msra.mxu0 0.0
        %851 = vmatprep.subr.mxu0 0.0
        %852 = vmatpush1.msra.mxu0 0.0
        %853 = vmatprep.subr.mxu0 0.0
        %854 = vmatpush1.msra.mxu0 0.0
        %855 = vmatprep.subr.mxu0 0.0
        %856 = vmatpush1.msra.mxu0 0.0
        %857 = vmatprep.subr.mxu0 0.0
        %858 = vmatpush1.msra.mxu0 0.0
        %859 = vmatprep.subr.mxu0 0.0
        %860 = vmatpush1.msra.mxu0 0.0
        %861 = vmatprep.subr.mxu0 0.0
        %862 = vmatpush1.msra.mxu0 0.0
        %863 = vmatprep.subr.mxu0 0.0
        %864 = vmatpush1.msra.mxu0 0.0
        %865 = vmatprep.mubr.f32.mxu0 0.0
        %866 = vmatmul.mubr.f32.gmra.mrb[0].mxu0 %v754
        %v867 = vpop.f32.mrb[0].mxu0
        %v868 = vadd.f32 %v751, %v867
        %v869 = vpop.f32.mrb[0].mxu0
        %870 = vmatprep.mubr.f32.mxu0 0.0
        %871 = vmatmul.mubr.f32.gmra.mrb[0].mxu0 %v757
        %v872 = vpop.f32.mrb[0].mxu0
        %v873 = vadd.f32 %v751, %v872
        %v874 = vpop.f32.mrb[0].mxu0
        %875 = vmatprep.mubr.f32.mxu0 0.0
        %876 = vmatmul.mubr.f32.gmra.mrb[0].mxu0 %v760
        %v877 = vpop.f32.mrb[0].mxu0
        %v878 = vadd.f32 %v751, %v877
        %v879 = vpop.f32.mrb[0].mxu0
        %880 = vmatprep.mubr.f32.mxu0 0.0
        %881 = vmatmul.mubr.f32.gmra.mrb[0].mxu0 %v763
        %v882 = vpop.f32.mrb[0].mxu0
        %v883 = vadd.f32 %v751, %v882
        %v884 = vpop.f32.mrb[0].mxu0
        %885 = vmatprep.mubr.f32.mxu0 0.0
        %886 = vmatmul.mubr.f32.gmra.mrb[0].mxu0 %v766
        %v887 = vpop.f32.mrb[0].mxu0
        %v888 = vadd.f32 %v751, %v887
        %v889 = vpop.f32.mrb[0].mxu0
        %890 = vmatprep.mubr.f32.mxu0 0.0
        %891 = vmatmul.mubr.f32.gmra.mrb[0].mxu0 %v769
        %v892 = vpop.f32.mrb[0].mxu0
        %v893 = vadd.f32 %v751, %v892
        %v894 = vpop.f32.mrb[0].mxu0
        %895 = vmatprep.mubr.f32.mxu0 0.0
        %896 = vmatmul.mubr.f32.gmra.mrb[0].mxu0 %v772
        %v897 = vpop.f32.mrb[0].mxu0
        %v898 = vadd.f32 %v751, %v897
        %v899 = vpop.f32.mrb[0].mxu0
        %900 = vmatprep.mubr.f32.mxu0 0.0
        %901 = vmatmul.mubr.f32.gmra.mrb[0].mxu0 %v775
        %v902 = vpop.f32.mrb[0].mxu0
        %v903 = vadd.f32 %v751, %v902
        %v904 = vpop.f32.mrb[0].mxu0
        %905 = vmatprep.mubr.f32.mxu0 0.0
        %906 = vmatmul.mubr.f32.gmra.mrb[0].mxu0 %v778
        %v907 = vpop.f32.mrb[0].mxu0
        %v908 = vadd.f32 %v751, %v907
        %v909 = vpop.f32.mrb[0].mxu0
        %910 = vmatprep.mubr.f32.mxu0 0.0
        %911 = vmatmul.mubr.f32.gmra.mrb[0].mxu0 %v781
        %v912 = vpop.f32.mrb[0].mxu0
        %v913 = vadd.f32 %v751, %v912
        %v914 = vpop.f32.mrb[0].mxu0
        %915 = vmatprep.mubr.f32.mxu0 0.0
        %916 = vmatmul.mubr.f32.gmra.mrb[0].mxu0 %v784
        %v917 = vpop.f32.mrb[0].mxu0
        %v918 = vadd.f32 %v751, %v917
        %v919 = vpop.f32.mrb[0].mxu0
        %920 = vmatprep.mubr.f32.mxu0 0.0
        %921 = vmatmul.mubr.f32.gmra.mrb[0].mxu0 %v787
        %v922 = vpop.f32.mrb[0].mxu0
        %v923 = vadd.f32 %v751, %v922
        %v924 = vpop.f32.mrb[0].mxu0
        %925 = vmatprep.mubr.f32.mxu0 0.0
        %926 = vmatmul.mubr.f32.gmra.mrb[0].mxu0 %v790
        %v927 = vpop.f32.mrb[0].mxu0
        %v928 = vadd.f32 %v751, %v927
        %v929 = vpop.f32.mrb[0].mxu0
        %930 = vmatprep.mubr.f32.mxu0 0.0
        %931 = vmatmul.mubr.f32.gmra.mrb[0].mxu0 %v793
        %v932 = vpop.f32.mrb[0].mxu0
        %v933 = vadd.f32 %v751, %v932
        %v934 = vpop.f32.mrb[0].mxu0
        %935 = vmatprep.mubr.f32.mxu0 0.0
        %936 = vmatmul.mubr.f32.gmra.mrb[0].mxu0 %v796
        %v937 = vpop.f32.mrb[0].mxu0
        %v938 = vadd.f32 %v751, %v937
        %v939 = vpop.f32.mrb[0].mxu0
        %940 = vmatprep.mubr.f32.mxu0 0.0
        %941 = vmatmul.mubr.f32.gmra.mrb[0].mxu0 %v799
        %v942 = vpop.f32.mrb[0].mxu0
        %v943 = vadd.f32 %v751, %v942
        %v944 = vpop.f32.mrb[0].mxu0
        %945 = vdwg.mxu0
        %v946 = vld [vmem:[%s377] sm:$0x3]
        %v947 = vld [vmem:[%s377 + $0x2] sm:$0x3]
        %v948 = vld [vmem:[%s377 + $0x4] sm:$0x3]
        %v949 = vld [vmem:[%s377 + $0x6] sm:$0x3]
        %v950 = vld [vmem:[%s377 + $0x8] sm:$0x3]
        %v951 = vld [vmem:[%s377 + $0xa] sm:$0x3]
        %v952 = vld [vmem:[%s377 + $0xc] sm:$0x3]
        %v953 = vld [vmem:[%s377 + $0xe] sm:$0x3]
        %v954 = vld [vmem:[%s377 + $0x10] sm:$0x3]
        %v955 = vld [vmem:[%s377 + $0x12] sm:$0x3]
        %v956 = vld [vmem:[%s377 + $0x14] sm:$0x3]
        %v957 = vld [vmem:[%s377 + $0x16] sm:$0x3]
        %v958 = vld [vmem:[%s377 + $0x18] sm:$0x3]
        %v959 = vld [vmem:[%s377 + $0x1a] sm:$0x3]
        %v960 = vld [vmem:[%s377 + $0x1c] sm:$0x3]
        %v961 = vld [vmem:[%s377 + $0x1e] sm:$0x3]
        %v962 = vunpack.c.0.s8 %v946
        %v963 = vunpack.c.0.s8 %v947
        %v964 = vunpack.c.0.s8 %v948
        %v965 = vunpack.c.0.s8 %v949
        %v966 = vunpack.c.0.s8 %v950
        %v967 = vunpack.c.0.s8 %v951
        %v968 = vunpack.c.0.s8 %v952
        %v969 = vunpack.c.0.s8 %v953
        %v970 = vunpack.c.0.s8 %v954
        %v971 = vunpack.c.0.s8 %v955
        %v972 = vunpack.c.0.s8 %v956
        %v973 = vunpack.c.0.s8 %v957
        %v974 = vunpack.c.0.s8 %v958
        %v975 = vunpack.c.0.s8 %v959
        %v976 = vunpack.c.0.s8 %v960
        %v977 = vunpack.c.0.s8 %v961
        %v978 = vlaneseq
        %v979 = vand.u32 %v978, 127
        %980 = vset.pattern.permute.xlu0 0
        %981 = vperm.xlu0 %980, %v962
        %v982 = vpop.permute.xlu0 %981
        %983 = vset.pattern.permute.xlu0 0
        %984 = vperm.xlu0 %983, %v963
        %v985 = vpop.permute.xlu0 %984
        %986 = vset.pattern.permute.xlu0 0
        %987 = vperm.xlu0 %986, %v964
        %v988 = vpop.permute.xlu0 %987
        %989 = vset.pattern.permute.xlu0 0
        %990 = vperm.xlu0 %989, %v965
        %v991 = vpop.permute.xlu0 %990
        %992 = vset.pattern.permute.xlu0 0
        %993 = vperm.xlu0 %992, %v966
        %v994 = vpop.permute.xlu0 %993
        %995 = vset.pattern.permute.xlu0 0
        %996 = vperm.xlu0 %995, %v967
        %v997 = vpop.permute.xlu0 %996
        %998 = vset.pattern.permute.xlu0 0
        %999 = vperm.xlu0 %998, %v968
        %v1000 = vpop.permute.xlu0 %999
        %1001 = vset.pattern.permute.xlu0 0
        %1002 = vperm.xlu0 %1001, %v969
        %v1003 = vpop.permute.xlu0 %1002
        %1004 = vset.pattern.permute.xlu0 0
        %1005 = vperm.xlu0 %1004, %v970
        %v1006 = vpop.permute.xlu0 %1005
        %1007 = vset.pattern.permute.xlu0 0
        %1008 = vperm.xlu0 %1007, %v971
        %v1009 = vpop.permute.xlu0 %1008
        %1010 = vset.pattern.permute.xlu0 0
        %1011 = vperm.xlu0 %1010, %v972
        %v1012 = vpop.permute.xlu0 %1011
        %1013 = vset.pattern.permute.xlu0 0
        %1014 = vperm.xlu0 %1013, %v973
        %v1015 = vpop.permute.xlu0 %1014
        %1016 = vset.pattern.permute.xlu0 0
        %1017 = vperm.xlu0 %1016, %v974
        %v1018 = vpop.permute.xlu0 %1017
        %1019 = vset.pattern.permute.xlu0 0
        %1020 = vperm.xlu0 %1019, %v975
        %v1021 = vpop.permute.xlu0 %1020
        %1022 = vset.pattern.permute.xlu0 0
        %1023 = vperm.xlu0 %1022, %v976
        %v1024 = vpop.permute.xlu0 %1023
        %1025 = vset.pattern.permute.xlu0 0
        %1026 = vperm.xlu0 %1025, %v977
        %v1027 = vpop.permute.xlu0 %1026
        %vm1028 = vcmp.eq.s32.totalorder %v982, %v979
        %vm1029 = vcmp.eq.s32.totalorder %v985, %v979
        %vm1030 = vcmp.eq.s32.totalorder %v988, %v979
        %vm1031 = vcmp.eq.s32.totalorder %v991, %v979
        %vm1032 = vcmp.eq.s32.totalorder %v994, %v979
        %vm1033 = vcmp.eq.s32.totalorder %v997, %v979
        %vm1034 = vcmp.eq.s32.totalorder %v1000, %v979
        %vm1035 = vcmp.eq.s32.totalorder %v1003, %v979
        %vm1036 = vcmp.eq.s32.totalorder %v1006, %v979
        %vm1037 = vcmp.eq.s32.totalorder %v1009, %v979
        %vm1038 = vcmp.eq.s32.totalorder %v1012, %v979
        %vm1039 = vcmp.eq.s32.totalorder %v1015, %v979
        %vm1040 = vcmp.eq.s32.totalorder %v1018, %v979
        %vm1041 = vcmp.eq.s32.totalorder %v1021, %v979
        %vm1042 = vcmp.eq.s32.totalorder %v1024, %v979
        %vm1043 = vcmp.eq.s32.totalorder %v1027, %v979
        %v1044 = vsel %vm1028, 1, 0
        %v1045 = vsel %vm1029, 1, 0
        %v1046 = vsel %vm1030, 1, 0
        %v1047 = vsel %vm1031, 1, 0
        %v1048 = vsel %vm1032, 1, 0
        %v1049 = vsel %vm1033, 1, 0
        %v1050 = vsel %vm1034, 1, 0
        %v1051 = vsel %vm1035, 1, 0
        %v1052 = vsel %vm1036, 1, 0
        %v1053 = vsel %vm1037, 1, 0
        %v1054 = vsel %vm1038, 1, 0
        %v1055 = vsel %vm1039, 1, 0
        %v1056 = vsel %vm1040, 1, 0
        %v1057 = vsel %vm1041, 1, 0
        %v1058 = vsel %vm1042, 1, 0
        %v1059 = vsel %vm1043, 1, 0
        %v1060 = vcvt.s32.f32 %v1044
        %v1061 = vcvt.s32.f32 %v1045
        %v1062 = vcvt.s32.f32 %v1046
        %v1063 = vcvt.s32.f32 %v1047
        %v1064 = vcvt.s32.f32 %v1048
        %v1065 = vcvt.s32.f32 %v1049
        %v1066 = vcvt.s32.f32 %v1050
        %v1067 = vcvt.s32.f32 %v1051
        %v1068 = vcvt.s32.f32 %v1052
        %v1069 = vcvt.s32.f32 %v1053
        %v1070 = vcvt.s32.f32 %v1054
        %v1071 = vcvt.s32.f32 %v1055
        %v1072 = vcvt.s32.f32 %v1056
        %v1073 = vcvt.s32.f32 %v1057
        %v1074 = vcvt.s32.f32 %v1058
        %v1075 = vcvt.s32.f32 %v1059
        %v1076 = vld [vmem:[%s6] sm:$0xff]
        %v1077 = vld [vmem:[%s6 + $0x8] sm:$0xff]
        %vm1078 = vcmask 130048
        %v1080 = vsel %vm1078, %v1060, 0
        %v1083 = vsel %vm1078, %v1061, 0
        %v1086 = vsel %vm1078, %v1062, 0
        %v1089 = vsel %vm1078, %v1063, 0
        %v1092 = vsel %vm1078, %v1064, 0
        %v1095 = vsel %vm1078, %v1065, 0
        %v1098 = vsel %vm1078, %v1066, 0
        %v1101 = vsel %vm1078, %v1067, 0
        %v1104 = vsel %vm1078, %v1068, 0
        %v1107 = vsel %vm1078, %v1069, 0
        %v1110 = vsel %vm1078, %v1070, 0
        %v1113 = vsel %vm1078, %v1071, 0
        %v1116 = vsel %vm1078, %v1072, 0
        %v1119 = vsel %vm1078, %v1073, 0
        %v1122 = vsel %vm1078, %v1074, 0
        %v1125 = vsel %vm1078, %v1075, 0
        %1127 = vmatprep.subr.mxu0 0.0
        %1128 = vmatpush1.msra.mxu0 %v1076
        %1129 = vmatprep.subr.mxu0 0.0
        %1130 = vmatpush1.msra.mxu0 %v1077
        %1131 = vmatprep.subr.mxu0 0.0
        %1132 = vmatpush1.msra.mxu0 0.0
        %1133 = vmatprep.subr.mxu0 0.0
        %1134 = vmatpush1.msra.mxu0 0.0
        %1135 = vmatprep.subr.mxu0 0.0
        %1136 = vmatpush1.msra.mxu0 0.0
        %1137 = vmatprep.subr.mxu0 0.0
        %1138 = vmatpush1.msra.mxu0 0.0
        %1139 = vmatprep.subr.mxu0 0.0
        %1140 = vmatpush1.msra.mxu0 0.0
        %1141 = vmatprep.subr.mxu0 0.0
        %1142 = vmatpush1.msra.mxu0 0.0
        %1143 = vmatprep.subr.mxu0 0.0
        %1144 = vmatpush1.msra.mxu0 0.0
        %1145 = vmatprep.subr.mxu0 0.0
        %1146 = vmatpush1.msra.mxu0 0.0
        %1147 = vmatprep.subr.mxu0 0.0
        %1148 = vmatpush1.msra.mxu0 0.0
        %1149 = vmatprep.subr.mxu0 0.0
        %1150 = vmatpush1.msra.mxu0 0.0
        %1151 = vmatprep.subr.mxu0 0.0
        %1152 = vmatpush1.msra.mxu0 0.0
        %1153 = vmatprep.subr.mxu0 0.0
        %1154 = vmatpush1.msra.mxu0 0.0
        %1155 = vmatprep.subr.mxu0 0.0
        %1156 = vmatpush1.msra.mxu0 0.0
        %1157 = vmatprep.subr.mxu0 0.0
        %1158 = vmatpush1.msra.mxu0 0.0
        %1159 = vmatprep.subr.mxu0 0.0
        %1160 = vmatpush1.msra.mxu0 0.0
        %1161 = vmatprep.subr.mxu0 0.0
        %1162 = vmatpush1.msra.mxu0 0.0
        %1163 = vmatprep.subr.mxu0 0.0
        %1164 = vmatpush1.msra.mxu0 0.0
        %1165 = vmatprep.subr.mxu0 0.0
        %1166 = vmatpush1.msra.mxu0 0.0
        %1167 = vmatprep.subr.mxu0 0.0
        %1168 = vmatpush1.msra.mxu0 0.0
        %1169 = vmatprep.subr.mxu0 0.0
        %1170 = vmatpush1.msra.mxu0 0.0
        %1171 = vmatprep.subr.mxu0 0.0
        %1172 = vmatpush1.msra.mxu0 0.0
        %1173 = vmatprep.subr.mxu0 0.0
        %1174 = vmatpush1.msra.mxu0 0.0
        %1175 = vmatprep.subr.mxu0 0.0
        %1176 = vmatpush1.msra.mxu0 0.0
        %1177 = vmatprep.subr.mxu0 0.0
        %1178 = vmatpush1.msra.mxu0 0.0
        %1179 = vmatprep.subr.mxu0 0.0
        %1180 = vmatpush1.msra.mxu0 0.0
        %1181 = vmatprep.subr.mxu0 0.0
        %1182 = vmatpush1.msra.mxu0 0.0
        %1183 = vmatprep.subr.mxu0 0.0
        %1184 = vmatpush1.msra.mxu0 0.0
        %1185 = vmatprep.subr.mxu0 0.0
        %1186 = vmatpush1.msra.mxu0 0.0
        %1187 = vmatprep.subr.mxu0 0.0
        %1188 = vmatpush1.msra.mxu0 0.0
        %1189 = vmatprep.subr.mxu0 0.0
        %1190 = vmatpush1.msra.mxu0 0.0
        %1191 = vmatprep.mubr.f32.mxu0 0.0
        %1192 = vmatmul.mubr.f32.gmra.mrb[0].mxu0 %v1080
        %v1193 = vpop.f32.mrb[0].mxu0
        %v1194 = vadd.f32 0.0, %v1193
        %v1195 = vpop.f32.mrb[0].mxu0
        %1196 = vmatprep.mubr.f32.mxu0 0.0
        %1197 = vmatmul.mubr.f32.gmra.mrb[0].mxu0 %v1083
        %v1198 = vpop.f32.mrb[0].mxu0
        %v1199 = vadd.f32 0.0, %v1198
        %v1200 = vpop.f32.mrb[0].mxu0
        %1201 = vmatprep.mubr.f32.mxu0 0.0
        %1202 = vmatmul.mubr.f32.gmra.mrb[0].mxu0 %v1086
        %v1203 = vpop.f32.mrb[0].mxu0
        %v1204 = vadd.f32 0.0, %v1203
        %v1205 = vpop.f32.mrb[0].mxu0
        %1206 = vmatprep.mubr.f32.mxu0 0.0
        %1207 = vmatmul.mubr.f32.gmra.mrb[0].mxu0 %v1089
        %v1208 = vpop.f32.mrb[0].mxu0
        %v1209 = vadd.f32 0.0, %v1208
        %v1210 = vpop.f32.mrb[0].mxu0
        %1211 = vmatprep.mubr.f32.mxu0 0.0
        %1212 = vmatmul.mubr.f32.gmra.mrb[0].mxu0 %v1092
        %v1213 = vpop.f32.mrb[0].mxu0
        %v1214 = vadd.f32 0.0, %v1213
        %v1215 = vpop.f32.mrb[0].mxu0
        %1216 = vmatprep.mubr.f32.mxu0 0.0
        %1217 = vmatmul.mubr.f32.gmra.mrb[0].mxu0 %v1095
        %v1218 = vpop.f32.mrb[0].mxu0
        %v1219 = vadd.f32 0.0, %v1218
        %v1220 = vpop.f32.mrb[0].mxu0
        %1221 = vmatprep.mubr.f32.mxu0 0.0
        %1222 = vmatmul.mubr.f32.gmra.mrb[0].mxu0 %v1098
        %v1223 = vpop.f32.mrb[0].mxu0
        %v1224 = vadd.f32 0.0, %v1223
        %v1225 = vpop.f32.mrb[0].mxu0
        %1226 = vmatprep.mubr.f32.mxu0 0.0
        %1227 = vmatmul.mubr.f32.gmra.mrb[0].mxu0 %v1101
        %v1228 = vpop.f32.mrb[0].mxu0
        %v1229 = vadd.f32 0.0, %v1228
        %v1230 = vpop.f32.mrb[0].mxu0
        %1231 = vmatprep.mubr.f32.mxu0 0.0
        %1232 = vmatmul.mubr.f32.gmra.mrb[0].mxu0 %v1104
        %v1233 = vpop.f32.mrb[0].mxu0
        %v1234 = vadd.f32 0.0, %v1233
        %v1235 = vpop.f32.mrb[0].mxu0
        %1236 = vmatprep.mubr.f32.mxu0 0.0
        %1237 = vmatmul.mubr.f32.gmra.mrb[0].mxu0 %v1107
        %v1238 = vpop.f32.mrb[0].mxu0
        %v1239 = vadd.f32 0.0, %v1238
        %v1240 = vpop.f32.mrb[0].mxu0
        %1241 = vmatprep.mubr.f32.mxu0 0.0
        %1242 = vmatmul.mubr.f32.gmra.mrb[0].mxu0 %v1110
        %v1243 = vpop.f32.mrb[0].mxu0
        %v1244 = vadd.f32 0.0, %v1243
        %v1245 = vpop.f32.mrb[0].mxu0
        %1246 = vmatprep.mubr.f32.mxu0 0.0
        %1247 = vmatmul.mubr.f32.gmra.mrb[0].mxu0 %v1113
        %v1248 = vpop.f32.mrb[0].mxu0
        %v1249 = vadd.f32 0.0, %v1248
        %v1250 = vpop.f32.mrb[0].mxu0
        %1251 = vmatprep.mubr.f32.mxu0 0.0
        %1252 = vmatmul.mubr.f32.gmra.mrb[0].mxu0 %v1116
        %v1253 = vpop.f32.mrb[0].mxu0
        %v1254 = vadd.f32 0.0, %v1253
        %v1255 = vpop.f32.mrb[0].mxu0
        %1256 = vmatprep.mubr.f32.mxu0 0.0
        %1257 = vmatmul.mubr.f32.gmra.mrb[0].mxu0 %v1119
        %v1258 = vpop.f32.mrb[0].mxu0
        %v1259 = vadd.f32 0.0, %v1258
        %v1260 = vpop.f32.mrb[0].mxu0
        %1261 = vmatprep.mubr.f32.mxu0 0.0
        %1262 = vmatmul.mubr.f32.gmra.mrb[0].mxu0 %v1122
        %v1263 = vpop.f32.mrb[0].mxu0
        %v1264 = vadd.f32 0.0, %v1263
        %v1265 = vpop.f32.mrb[0].mxu0
        %1266 = vmatprep.mubr.f32.mxu0 0.0
        %1267 = vmatmul.mubr.f32.gmra.mrb[0].mxu0 %v1125
        %v1268 = vpop.f32.mrb[0].mxu0
        %v1269 = vadd.f32 0.0, %v1268
        %v1270 = vpop.f32.mrb[0].mxu0
        %1271 = vdwg.mxu0
        %v1272 = vstv %s740
        %v1273 = vmul.f32 %v868, %v1272
        %v1274 = vmul.f32 %v873, %v1272
        %v1275 = vmul.f32 %v878, %v1272
        %v1276 = vmul.f32 %v883, %v1272
        %v1277 = vmul.f32 %v888, %v1272
        %v1278 = vmul.f32 %v893, %v1272
        %v1279 = vmul.f32 %v898, %v1272
        %v1280 = vmul.f32 %v903, %v1272
        %v1281 = vmul.f32 %v908, %v1272
        %v1282 = vmul.f32 %v913, %v1272
        %v1283 = vmul.f32 %v918, %v1272
        %v1284 = vmul.f32 %v923, %v1272
        %v1285 = vmul.f32 %v928, %v1272
        %v1286 = vmul.f32 %v933, %v1272
        %v1287 = vmul.f32 %v938, %v1272
        %v1288 = vmul.f32 %v943, %v1272
        %v1289 = vstv %s741
        %v1290 = vadd.f32 %v1273, %v1289
        %v1291 = vadd.f32 %v1274, %v1289
        %v1292 = vadd.f32 %v1275, %v1289
        %v1293 = vadd.f32 %v1276, %v1289
        %v1294 = vadd.f32 %v1277, %v1289
        %v1295 = vadd.f32 %v1278, %v1289
        %v1296 = vadd.f32 %v1279, %v1289
        %v1297 = vadd.f32 %v1280, %v1289
        %v1298 = vadd.f32 %v1281, %v1289
        %v1299 = vadd.f32 %v1282, %v1289
        %v1300 = vadd.f32 %v1283, %v1289
        %v1301 = vadd.f32 %v1284, %v1289
        %v1302 = vadd.f32 %v1285, %v1289
        %v1303 = vadd.f32 %v1286, %v1289
        %v1304 = vadd.f32 %v1287, %v1289
        %v1305 = vadd.f32 %v1288, %v1289
        %v1306 = vadd.f32 %v1290, %v1194
        %v1307 = vadd.f32 %v1291, %v1199
        %v1308 = vadd.f32 %v1292, %v1204
        %v1309 = vadd.f32 %v1293, %v1209
        %v1310 = vadd.f32 %v1294, %v1214
        %v1311 = vadd.f32 %v1295, %v1219
        %v1312 = vadd.f32 %v1296, %v1224
        %v1313 = vadd.f32 %v1297, %v1229
        %v1314 = vadd.f32 %v1298, %v1234
        %v1315 = vadd.f32 %v1299, %v1239
        %v1316 = vadd.f32 %v1300, %v1244
        %v1317 = vadd.f32 %v1301, %v1249
        %v1318 = vadd.f32 %v1302, %v1254
        %v1319 = vadd.f32 %v1303, %v1259
        %v1320 = vadd.f32 %v1304, %v1264
        %v1321 = vadd.f32 %v1305, %v1269
        %v1322 = vld [vmem:[%s383] sm:$0x1]
        %v1323 = vlaneseq
        %v1324 = vshrl.u32 %v1323, 7
        %v1325 = vlaneseq
        %v1326 = vshrl.u32 %v1325, 7
        %v1327 = vsub.s32 0, %v1326
        %v1328 = vrot.slane %v1322, %v1327
        %vm1329 = vcmp.eq.s32.totalorder %v1324, %v1328
        %v1330 = vsel %vm1329, 1, 0
        %v1331 = vcvt.s32.f32 %v1330
        %v1332 = vld [vmem:[%s388] sm:$0xff]
        %1333 = vmatprep.subr.mxu0 0.0
        %1334 = vmatpush1.msra.mxu0 %v1306
        %1335 = vmatprep.subr.mxu0 0.0
        %1336 = vmatpush1.msra.mxu0 %v1307
        %1337 = vmatprep.subr.mxu0 0.0
        %1338 = vmatpush1.msra.mxu0 %v1308
        %1339 = vmatprep.subr.mxu0 0.0
        %1340 = vmatpush1.msra.mxu0 %v1309
        %1341 = vmatprep.subr.mxu0 0.0
        %1342 = vmatpush1.msra.mxu0 %v1310
        %1343 = vmatprep.subr.mxu0 0.0
        %1344 = vmatpush1.msra.mxu0 %v1311
        %1345 = vmatprep.subr.mxu0 0.0
        %1346 = vmatpush1.msra.mxu0 %v1312
        %1347 = vmatprep.subr.mxu0 0.0
        %1348 = vmatpush1.msra.mxu0 %v1313
        %1349 = vmatprep.subr.mxu0 0.0
        %1350 = vmatpush1.msra.mxu0 %v1314
        %1351 = vmatprep.subr.mxu0 0.0
        %1352 = vmatpush1.msra.mxu0 %v1315
        %1353 = vmatprep.subr.mxu0 0.0
        %1354 = vmatpush1.msra.mxu0 %v1316
        %1355 = vmatprep.subr.mxu0 0.0
        %1356 = vmatpush1.msra.mxu0 %v1317
        %1357 = vmatprep.subr.mxu0 0.0
        %1358 = vmatpush1.msra.mxu0 %v1318
        %1359 = vmatprep.subr.mxu0 0.0
        %1360 = vmatpush1.msra.mxu0 %v1319
        %1361 = vmatprep.subr.mxu0 0.0
        %1362 = vmatpush1.msra.mxu0 %v1320
        %1363 = vmatprep.subr.mxu0 0.0
        %1364 = vmatpush1.msra.mxu0 %v1321
        %1365 = vmatprep.subr.mxu0 0.0
        %1366 = vmatpush1.msra.mxu0 0.0
        %1367 = vmatprep.subr.mxu0 0.0
        %1368 = vmatpush1.msra.mxu0 0.0
        %1369 = vmatprep.subr.mxu0 0.0
        %1370 = vmatpush1.msra.mxu0 0.0
        %1371 = vmatprep.subr.mxu0 0.0
        %1372 = vmatpush1.msra.mxu0 0.0
        %1373 = vmatprep.subr.mxu0 0.0
        %1374 = vmatpush1.msra.mxu0 0.0
        %1375 = vmatprep.subr.mxu0 0.0
        %1376 = vmatpush1.msra.mxu0 0.0
        %1377 = vmatprep.subr.mxu0 0.0
        %1378 = vmatpush1.msra.mxu0 0.0
        %1379 = vmatprep.subr.mxu0 0.0
        %1380 = vmatpush1.msra.mxu0 0.0
        %1381 = vmatprep.subr.mxu0 0.0
        %1382 = vmatpush1.msra.mxu0 0.0
        %1383 = vmatprep.subr.mxu0 0.0
        %1384 = vmatpush1.msra.mxu0 0.0
        %1385 = vmatprep.subr.mxu0 0.0
        %1386 = vmatpush1.msra.mxu0 0.0
        %1387 = vmatprep.subr.mxu0 0.0
        %1388 = vmatpush1.msra.mxu0 0.0
        %1389 = vmatprep.subr.mxu0 0.0
        %1390 = vmatpush1.msra.mxu0 0.0
        %1391 = vmatprep.subr.mxu0 0.0
        %1392 = vmatpush1.msra.mxu0 0.0
        %1393 = vmatprep.subr.mxu0 0.0
        %1394 = vmatpush1.msra.mxu0 0.0
        %1395 = vmatprep.subr.mxu0 0.0
        %1396 = vmatpush1.msra.mxu0 0.0
        %1397 = vmatprep.mubr.f32.mxu0 0.0
        %1398 = vmatmul.mubr.f32.gmra.mrb[0].mxu0 %v1331
        %v1399 = vpop.f32.mrb[0].mxu0
        %v1400 = vadd.f32 0.0, %v1399
        %v1401 = vpop.f32.mrb[0].mxu0
        %1402 = vdwg.mxu0
        %v1403 = vadd.f32 %v1332, %v1400
        %vm1404 = vcmask 7168
        %1405 = vst.msk [vmem:[%s388] sm:$0xff] %vm1404, %v1403
        %p1406 = scmp.lt.s32.totalorder %s24, 1
        %s1407 = scalar_select %p1406, %s24, 1
        %s1408 = smul.addr %s1407, 8
        %s1409 = scalar_lea.vmem %s8, %s1408
        // Predicated region
        $region61: #{tpu_custom_call.1} parent=51 // pred_check
          %p1410 = pneg %p239
        $region62: #{tpu_custom_call.1} parent=51 // pred_check_branch
          %1412 = sbr.rel (%p1410) target = $region64
        $region63: #{tpu_custom_call.1} parent=51 // pred_region
          _
        $region64: #{tpu_custom_call.1} parent=51 // pred_fallthru
          _
      $region52: #{tpu_custom_call.1} parent=5 // pred_fallthru
        _
      %p1413 = scmp.le.s32.totalorder 2, %s15
      // Predicated region
      $region65: #{tpu_custom_call.1} parent=5 // pred_check
        %p1414 = pneg %p1413
      $region66: #{tpu_custom_call.1} parent=5 // pred_check_branch
        %1416 = sbr.rel (%p1414) target = $region68
      $region67: #{tpu_custom_call.1} parent=5 // pred_region
        %s1417 = ssub.s32 %s15, 2
        // Predicated region
        $region69: #{tpu_custom_call.1} parent=67 // pred_check
          %p1418 = pneg %p245
        $region70: #{tpu_custom_call.1} parent=67 // pred_check_branch
          %1420 = sbr.rel (%p1418) target = $region72
        $region71: #{tpu_custom_call.1} parent=67 // pred_region
          %p1421 = scmp.lt.s32.totalorder %s26, 1
          %s1422 = scalar_select %p1421, %s26, 1
          %s1423 = smul.addr %s1422, 8
          %s1424 = scalar_lea.vmem %s8, %s1423
        $region72: #{tpu_custom_call.1} parent=67 // pred_fallthru
          _
      $region68: #{tpu_custom_call.1} parent=5 // pred_fallthru
        _
    $region6: #{tpu_custom_call.1} parent=1 // loop_footer
      %s19 = sadd.s32 1, %s15
    $region7: #{tpu_custom_call.1} parent=1 // loop_footer_branch
      %14 = sbr.rel target = $region3
    $region8: #{tpu_custom_call.1} parent=1 // loop_exit
      _
    %1425 = vsyncpa [#allocation3], 1
    %s1426 = scalar_lea.sflag [#allocation3], 1
    %1427 = vsyncpa %s1426, 1

</llo_original>
